<compile_context>
chip_gen: v6e
topology: v6e:2x2x1
jax: 0.10.0
libtpu: 0.0.40
codegen_flags: <defaults>
</compile_context>

<pallas_src>
import functools
import math

import jax
import jax.numpy as jnp
from jax.experimental import pallas as pl
from jax.experimental.pallas import tpu as pltpu


_SQRT_2_OVER_PI = math.sqrt(2.0 / math.pi)
_GELU_C = 0.044715
_INV_SQRT2 = 1.0 / math.sqrt(2.0)


def _gelu_tanh(x):
    # tanh-approx GELU: 0.5*x*(1+tanh(sqrt(2/pi)*(x + 0.044715*x^3)))
    # tanh lowers to the EUP (separate bundle slot) instead of a long VPU erf polynomial.
    return 0.5 * x * (1.0 + jnp.tanh(_SQRT_2_OVER_PI * (x + _GELU_C * x * x * x)))


def _gelu_exact(x):
    # PyTorch nn.GELU() default (approximate='none'); used only in the loose reference.
    return 0.5 * x * (1.0 + jax.lax.erf(x * _INV_SQRT2))


def _round_up(x, m):
    return ((x + m - 1) // m) * m


@functools.lru_cache(maxsize=1)
def _tpu_generation():
    """Best-effort TPU generation from device_kind (7 for v7x, 6 for v6e, ...); 0 if unknown."""
    try:
        kind = jax.devices()[0].device_kind.lower()
    except Exception:
        return 0
    if "tpu" not in kind:
        return 0
    for gen in (7, 6, 5, 4, 3, 2):
        if str(gen) in kind:
            return gen
    return 0


# -----------------------------------------------------------------------------
# Kernel
# -----------------------------------------------------------------------------
def _mlp_kernel(x_ref, w1_ref, b1_ref, w2_ref, b2_ref, w3_ref, b3_ref, o_ref,
                *, act_dtype):
    """One (blk, E_pad) batch tile through the whole MLP.

    Matmul operands are bf16 with f32 accumulation (MXU-native).  Bias-add happens in
    f32; GELU runs in `act_dtype` (bf16 on v6e/v7x, f32 on v5e).  Weights/biases are
    whole-array VMEM residents (single buffer, constant across grid steps).
    """
    cdt = w1_ref.dtype                       # bf16 matmul-operand dtype
    x = x_ref[...].astype(cdt)               # in-kernel cast: free VPU filler under the MXU

    h1 = jnp.dot(x, w1_ref[...], preferred_element_type=jnp.float32)
    h1 = _gelu_tanh((h1 + b1_ref[...]).astype(act_dtype))

    h2 = jnp.dot(h1.astype(cdt), w2_ref[...], preferred_element_type=jnp.float32)
    h2 = _gelu_tanh((h2 + b2_ref[...]).astype(act_dtype))

    y = jnp.dot(h2.astype(cdt), w3_ref[...], preferred_element_type=jnp.float32)
    o_ref[...] = (y + b3_ref[...]).astype(o_ref.dtype)


# -----------------------------------------------------------------------------
# Parameter prep (one-time, outside the hot path)
# -----------------------------------------------------------------------------
def prepare_params(params, compute_dtype=jnp.bfloat16):
    """Cast matmul operands to bf16 and pad the embedding dim to a multiple of 128 so
    every kernel load/store is lane-dense."""
    E = params["w1"].shape[0]
    E_pad = _round_up(E, 128)
    pe = E_pad - E
    return {
        "w1": jnp.pad(params["w1"], ((0, pe), (0, 0))).astype(compute_dtype),
        "b1": params["b1"].astype(jnp.float32),
        "w2": params["w2"].astype(compute_dtype),
        "b2": params["b2"].astype(jnp.float32),
        "w3": jnp.pad(params["w3"], ((0, 0), (0, pe))).astype(compute_dtype),
        "b3": jnp.pad(params["b3"], ((0, 0), (0, pe))).astype(jnp.float32),
    }


# -----------------------------------------------------------------------------
# VMEM budgeting (all Python ints at trace time)
# -----------------------------------------------------------------------------
def _vmem_bytes(blk, E_pad, x_itemsize, out_itemsize, act_itemsize):
    weights = (E_pad * 1024 + 1024 * 256 + 256 * E_pad) * 2          # bf16, single-buffered
    biases = (1024 + 256 + E_pad) * 4                                # f32
    x_pipe = 2 * blk * E_pad * x_itemsize                            # double-buffered in tile
    o_pipe = 2 * blk * E_pad * out_itemsize                          # double-buffered out tile
    inter = (blk * 1024 * (4 + act_itemsize + 2)                     # h1: f32 acc, act, bf16
             + blk * 256 * (4 + act_itemsize + 2)                    # h2
             + blk * E_pad * (2 + 4))                                # x bf16 cast + y f32
    return weights + biases + x_pipe + o_pipe + inter


# -----------------------------------------------------------------------------
# Forward wrapper
# -----------------------------------------------------------------------------
@functools.partial(jax.jit, static_argnames=("block_b", "out_dtype"))
def matching_model_forward(x, prepared, block_b=512, out_dtype=None):
    """x: (B, E) float32.  prepared: output of prepare_params (bf16 weights, padded E)."""
    B, E = x.shape
    w1, b1 = prepared["w1"], prepared["b1"]
    w2, b2 = prepared["w2"], prepared["b2"]
    w3, b3 = prepared["w3"], prepared["b3"]
    E_pad = w1.shape[0]

    gen = _tpu_generation()
    is_v7x = gen >= 7
    # v6e/v7x have bf16 VPU/EUP (2x packed elementwise); v5e (and unknown) stay f32.
    act_dtype = jnp.bfloat16 if gen >= 6 else jnp.float32
    # v7x has 64 MiB VMEM per TC -> cap well below physical; v5e/v6e have 128 MiB.
    vmem_cap = (48 << 20) if (is_v7x or gen == 0) else (96 << 20)

    out_np_dtype = x.dtype if out_dtype is None else jnp.dtype(out_dtype)

    # ---- batch tiling (Python ints at trace time) ---------------------------
    block_b = max(8, _round_up(block_b, 8))
    B_pad8 = _round_up(B, 8)
    blk = min(block_b, B_pad8)

    def _budget(b):
        need = _vmem_bytes(b, E_pad, x.dtype.itemsize, out_np_dtype.itemsize,
                           jnp.dtype(act_dtype).itemsize)
        return int(need * 1.25) + (2 << 20)          # +20-25% margin + base overhead

    # Shrink the batch tile until the estimate fits the generation-aware budget.
    while blk > 8 and _budget(blk) > vmem_cap:
        blk = max(8, _round_up(blk // 2, 8))

    # Keep >= 2 grid steps on v7x only (2 TCs share the "parallel" axis there;
    # on v5e/v6e the grid is a serial loop and splitting just adds step overhead).
    if is_v7x and B_pad8 <= blk and blk % 16 == 0:
        blk //= 2

    B_pad = _round_up(B_pad8, blk)
    grid = (B_pad // blk,)

    # ---- pad input to (B_pad, E_pad); keep it f32 (cast happens in-kernel) ---
    x_p = x
    if (B_pad, E_pad) != (B, E):
        x_p = jnp.pad(x, ((0, B_pad - B), (0, E_pad - E)))

    vmem_limit = max(min(_budget(blk), vmem_cap), 8 << 20)

    # Weights/biases: whole-array resident in VMEM (single buffer, no per-step DMA).
    resident = pl.BlockSpec(memory_space=pltpu.MemorySpace.VMEM)

    out = pl.pallas_call(
        functools.partial(_mlp_kernel, act_dtype=act_dtype),
        out_shape=jax.ShapeDtypeStruct((B_pad, E_pad), out_np_dtype),
        grid_spec=pltpu.PrefetchScalarGridSpec(
            num_scalar_prefetch=0,
            grid=grid,
            in_specs=[
                pl.BlockSpec((blk, E_pad), lambda i: (i, 0)),  # x batch tile (f32)
                resident, resident,   # w1, b1
                resident, resident,   # w2, b2
                resident, resident,   # w3, b3
            ],
            out_specs=pl.BlockSpec((blk, E_pad), lambda i: (i, 0)),
        ),
        compiler_params=pltpu.CompilerParams(
            dimension_semantics=("parallel",),
            vmem_limit_bytes=int(vmem_limit),
        ),
    )(x_p, w1, b1, w2, b2, w3, b3)

    return out[:B, :E]


# -----------------------------------------------------------------------------
# Init + references
# -----------------------------------------------------------------------------
def init_params(key, embed_dim):
    """Deterministic init mirroring nn.Linear default: U(-1/sqrt(fan_in), 1/sqrt(fan_in))."""
    dims = [(embed_dim, 1024), (1024, 256), (256, embed_dim)]
    params = {}
    for idx, (fan_in, fan_out) in enumerate(dims, start=1):
        key, kw, kb = jax.random.split(key, 3)
        bound = 1.0 / math.sqrt(fan_in)
        params[f"w{idx}"] = jax.random.uniform(
            kw, (fan_in, fan_out), jnp.float32, -bound, bound
        )
        params[f"b{idx}"] = jax.random.uniform(
            kb, (1, fan_out), jnp.float32, -bound, bound
        )
    return params


def reference_forward(x, params, act_dtype, compute_dtype=jnp.bfloat16):
    """Pure-JAX reference mirroring the kernel's recipe exactly
    (bf16 matmul operands, f32 accumulation, f32 bias-add, tanh GELU in act_dtype)."""
    def lin(h, w, b):
        return jnp.dot(h.astype(compute_dtype), w.astype(compute_dtype),
                       preferred_element_type=jnp.float32) + b
    h = _gelu_tanh(lin(x, params["w1"], params["b1"]).astype(act_dtype))
    h = _gelu_tanh(lin(h, params["w2"], params["b2"]).astype(act_dtype))
    return lin(h, params["w3"], params["b3"])


if __name__ == "__main__":
    key = jax.random.PRNGKey(0)
    embed_dim = 32   # small test shape; padded to 128 lanes inside the wrapper
    batch = 20       # intentionally ragged: exercises batch padding + output slicing

    k_params, k_x = jax.random.split(key)
    params = init_params(k_params, embed_dim)
    prepared = prepare_params(params)
    x = jax.random.normal(k_x, (batch, embed_dim), dtype=jnp.float32)

    out = matching_model_forward(x, prepared)
    out = jax.block_until_ready(out)
    assert out.shape == (batch, embed_dim)

    # Tight check vs a reference using the exact same dtype/GELU recipe as the kernel.
    act_dtype = jnp.bfloat16 if _tpu_generation() >= 6 else jnp.float32
    ref = reference_forward(x, params, act_dtype)
    assert jnp.allclose(out, ref, atol=2e-2, rtol=2e-2), "mismatch vs matching-recipe reference"

    # Loose sanity check vs the pure-f32, exact-erf PyTorch-equivalent math
    # (bf16 operands + tanh GELU introduce small, bounded deviation).
    ref_f32 = _gelu_exact(x @ params["w1"] + params["b1"])
    ref_f32 = _gelu_exact(ref_f32 @ params["w2"] + params["b2"])
    ref_f32 = ref_f32 @ params["w3"] + params["b3"]
    assert jnp.allclose(out, ref_f32, atol=7e-2, rtol=7e-2), "mismatch vs f32 reference"

    print("KERNEL_OK")
</pallas_src>

<mosaic_0001>
module attributes {stable_mosaic.version = 11 : i64} {
  func.func @_mlp_kernel(%arg0: i32, %arg1: memref<24x128xf32, #tpu.memory_space<vmem>>, %arg2: memref<128x1024xbf16, #tpu.memory_space<vmem>>, %arg3: memref<1x1024xf32, #tpu.memory_space<vmem>>, %arg4: memref<1024x256xbf16, #tpu.memory_space<vmem>>, %arg5: memref<1x256xf32, #tpu.memory_space<vmem>>, %arg6: memref<256x128xbf16, #tpu.memory_space<vmem>>, %arg7: memref<1x128xf32, #tpu.memory_space<vmem>>, %arg8: memref<24x128xf32, #tpu.memory_space<vmem>>) attributes {dimension_semantics = [#tpu.dimension_semantics<parallel>], iteration_bounds = array<i64: 1>, scalar_prefetch = 0 : i64, scratch_operands = 0 : i64, tpu.core_type = #tpu.core_type<tc>, window_params = [{transform_indices = @transform_0, window_bounds = array<i64: 24, 128>}, {pipeline_mode = #tpu.pipeline_mode<synchronous>, transform_indices = @transform_1, window_bounds = array<i64: 128, 1024>}, {pipeline_mode = #tpu.pipeline_mode<synchronous>, transform_indices = @transform_2, window_bounds = array<i64: 1, 1024>}, {pipeline_mode = #tpu.pipeline_mode<synchronous>, transform_indices = @transform_3, window_bounds = array<i64: 1024, 256>}, {pipeline_mode = #tpu.pipeline_mode<synchronous>, transform_indices = @transform_4, window_bounds = array<i64: 1, 256>}, {pipeline_mode = #tpu.pipeline_mode<synchronous>, transform_indices = @transform_5, window_bounds = array<i64: 256, 128>}, {pipeline_mode = #tpu.pipeline_mode<synchronous>, transform_indices = @transform_6, window_bounds = array<i64: 1, 128>}, {transform_indices = @transform_7, window_bounds = array<i64: 24, 128>}]} {
    %c0 = arith.constant 0 : index
    %c0_0 = arith.constant 0 : index
    %0 = vector.load %arg1[%c0, %c0_0] : memref<24x128xf32, #tpu.memory_space<vmem>>, vector<24x128xf32>
    %1 = arith.truncf %0 : vector<24x128xf32> to vector<24x128xbf16>
    %c0_1 = arith.constant 0 : index
    %c0_2 = arith.constant 0 : index
    %2 = vector.load %arg2[%c0_1, %c0_2] : memref<128x1024xbf16, #tpu.memory_space<vmem>>, vector<128x1024xbf16>
    %cst = arith.constant dense<0.000000e+00> : vector<24x1024xf32>
    %3 = tpu.matmul %1, %2, %cst {dimension_numbers = #tpu.dot_dimension_numbers<[1], [0], [0], [1], [0, 0, 1, 1], [], []>} : vector<24x128xbf16>, vector<128x1024xbf16>, vector<24x1024xf32> -> vector<24x1024xf32>
    %c0_3 = arith.constant 0 : index
    %c0_4 = arith.constant 0 : index
    %4 = vector.load %arg3[%c0_3, %c0_4] : memref<1x1024xf32, #tpu.memory_space<vmem>>, vector<1x1024xf32>
    %5 = vector.broadcast %4 : vector<1x1024xf32> to vector<24x1024xf32>
    %6 = arith.addf %3, %5 : vector<24x1024xf32>
    %cst_5 = arith.constant 5.000000e-01 : f32
    %7 = vector.broadcast %cst_5 : f32 to vector<24x1024xf32>
    %8 = arith.mulf %7, %6 : vector<24x1024xf32>
    %cst_6 = arith.constant 4.471500e-02 : f32
    %9 = vector.broadcast %cst_6 : f32 to vector<24x1024xf32>
    %10 = arith.mulf %9, %6 : vector<24x1024xf32>
    %11 = arith.mulf %10, %6 : vector<24x1024xf32>
    %12 = arith.mulf %11, %6 : vector<24x1024xf32>
    %13 = arith.addf %6, %12 : vector<24x1024xf32>
    %cst_7 = arith.constant 0.797884583 : f32
    %14 = vector.broadcast %cst_7 : f32 to vector<24x1024xf32>
    %15 = arith.mulf %14, %13 : vector<24x1024xf32>
    %16 = math.tanh %15 : vector<24x1024xf32>
    %cst_8 = arith.constant 1.000000e+00 : f32
    %17 = vector.broadcast %cst_8 : f32 to vector<24x1024xf32>
    %18 = arith.addf %17, %16 : vector<24x1024xf32>
    %19 = arith.mulf %8, %18 : vector<24x1024xf32>
    %20 = arith.truncf %19 : vector<24x1024xf32> to vector<24x1024xbf16>
    %c0_9 = arith.constant 0 : index
    %c0_10 = arith.constant 0 : index
    %21 = vector.load %arg4[%c0_9, %c0_10] : memref<1024x256xbf16, #tpu.memory_space<vmem>>, vector<1024x256xbf16>
    %cst_11 = arith.constant dense<0.000000e+00> : vector<24x256xf32>
    %22 = tpu.matmul %20, %21, %cst_11 {dimension_numbers = #tpu.dot_dimension_numbers<[1], [0], [0], [1], [0, 0, 1, 1], [], []>} : vector<24x1024xbf16>, vector<1024x256xbf16>, vector<24x256xf32> -> vector<24x256xf32>
    %c0_12 = arith.constant 0 : index
    %c0_13 = arith.constant 0 : index
    %23 = vector.load %arg5[%c0_12, %c0_13] : memref<1x256xf32, #tpu.memory_space<vmem>>, vector<1x256xf32>
    %24 = vector.broadcast %23 : vector<1x256xf32> to vector<24x256xf32>
    %25 = arith.addf %22, %24 : vector<24x256xf32>
    %cst_14 = arith.constant 5.000000e-01 : f32
    %26 = vector.broadcast %cst_14 : f32 to vector<24x256xf32>
    %27 = arith.mulf %26, %25 : vector<24x256xf32>
    %cst_15 = arith.constant 4.471500e-02 : f32
    %28 = vector.broadcast %cst_15 : f32 to vector<24x256xf32>
    %29 = arith.mulf %28, %25 : vector<24x256xf32>
    %30 = arith.mulf %29, %25 : vector<24x256xf32>
    %31 = arith.mulf %30, %25 : vector<24x256xf32>
    %32 = arith.addf %25, %31 : vector<24x256xf32>
    %cst_16 = arith.constant 0.797884583 : f32
    %33 = vector.broadcast %cst_16 : f32 to vector<24x256xf32>
    %34 = arith.mulf %33, %32 : vector<24x256xf32>
    %35 = math.tanh %34 : vector<24x256xf32>
    %cst_17 = arith.constant 1.000000e+00 : f32
    %36 = vector.broadcast %cst_17 : f32 to vector<24x256xf32>
    %37 = arith.addf %36, %35 : vector<24x256xf32>
    %38 = arith.mulf %27, %37 : vector<24x256xf32>
    %39 = arith.truncf %38 : vector<24x256xf32> to vector<24x256xbf16>
    %c0_18 = arith.constant 0 : index
    %c0_19 = arith.constant 0 : index
    %40 = vector.load %arg6[%c0_18, %c0_19] : memref<256x128xbf16, #tpu.memory_space<vmem>>, vector<256x128xbf16>
    %cst_20 = arith.constant dense<0.000000e+00> : vector<24x128xf32>
    %41 = tpu.matmul %39, %40, %cst_20 {dimension_numbers = #tpu.dot_dimension_numbers<[1], [0], [0], [1], [0, 0, 1, 1], [], []>} : vector<24x256xbf16>, vector<256x128xbf16>, vector<24x128xf32> -> vector<24x128xf32>
    %c0_21 = arith.constant 0 : index
    %c0_22 = arith.constant 0 : index
    %42 = vector.load %arg7[%c0_21, %c0_22] : memref<1x128xf32, #tpu.memory_space<vmem>>, vector<1x128xf32>
    %43 = vector.broadcast %42 : vector<1x128xf32> to vector<24x128xf32>
    %44 = arith.addf %41, %43 : vector<24x128xf32>
    %c0_23 = arith.constant 0 : index
    %c0_24 = arith.constant 0 : index
    %45 = vector.load %arg8[%c0_23, %c0_24] : memref<24x128xf32, #tpu.memory_space<vmem>>, vector<24x128xf32>
    tpu.vector_store %arg8[%c0_23, %c0_24], %44 {strides = array<i32>} : memref<24x128xf32, #tpu.memory_space<vmem>>, vector<24x128xf32>,
    return
  }
  func.func @transform_0(%arg0: i32) -> (i32, i32) {
    %c0_i32 = arith.constant 0 : i32
    %c0_i32_0 = arith.constant 0 : i32
    return %arg0, %c0_i32 : i32, i32
  }
  func.func @transform_1(%arg0: i32) -> (i32, i32) {
    %c0_i32 = arith.constant 0 : i32
    %c0_i32_0 = arith.constant 0 : i32
    %c0_i32_1 = arith.constant 0 : i32
    return %c0_i32, %c0_i32_0 : i32, i32
  }
  func.func @transform_2(%arg0: i32) -> (i32, i32) {
    %c0_i32 = arith.constant 0 : i32
    %c0_i32_0 = arith.constant 0 : i32
    %c0_i32_1 = arith.constant 0 : i32
    return %c0_i32, %c0_i32_0 : i32, i32
  }
  func.func @transform_3(%arg0: i32) -> (i32, i32) {
    %c0_i32 = arith.constant 0 : i32
    %c0_i32_0 = arith.constant 0 : i32
    %c0_i32_1 = arith.constant 0 : i32
    return %c0_i32, %c0_i32_0 : i32, i32
  }
  func.func @transform_4(%arg0: i32) -> (i32, i32) {
    %c0_i32 = arith.constant 0 : i32
    %c0_i32_0 = arith.constant 0 : i32
    %c0_i32_1 = arith.constant 0 : i32
    return %c0_i32, %c0_i32_0 : i32, i32
  }
  func.func @transform_5(%arg0: i32) -> (i32, i32) {
    %c0_i32 = arith.constant 0 : i32
    %c0_i32_0 = arith.constant 0 : i32
    %c0_i32_1 = arith.constant 0 : i32
    return %c0_i32, %c0_i32_0 : i32, i32
  }
  func.func @transform_6(%arg0: i32) -> (i32, i32) {
    %c0_i32 = arith.constant 0 : i32
    %c0_i32_0 = arith.constant 0 : i32
    %c0_i32_1 = arith.constant 0 : i32
    return %c0_i32, %c0_i32_0 : i32, i32
  }
  func.func @transform_7(%arg0: i32) -> (i32, i32) {
    %c0_i32 = arith.constant 0 : i32
    %c0_i32_0 = arith.constant 0 : i32
    return %arg0, %c0_i32 : i32, i32
  }
}

</mosaic_0001>

<llo_original>
// kernel: matching_model_forward.1
$region0: #{matching_model_forward.1}
  #allocation0 [shape = 'u32[]', space=smem, size = 0x4, offset = 0x4, fixed_abs, tag = 'smem constant byte address 0x4 - core index']
  #allocation1 [shape = 'u32[144,128]{1,0:T(1,128)}', space=vmem, size = 0x12000, scoped, tag = 'internal scratch']
  %s0 = inlined_call_operand.vmem [shape: f32[24,128], index: 0, kind: input, shape index: {}]
  %s1 = inlined_call_operand.hbm [shape: bf16[128,1024], index: 1, kind: input, shape index: {}]
  %s2 = inlined_call_operand.vmem [shape: f32[1,1024], index: 2, kind: input, shape index: {}]
  %s3 = inlined_call_operand.hbm [shape: bf16[1024,256], index: 3, kind: input, shape index: {}]
  %s4 = inlined_call_operand.vmem [shape: f32[1,256], index: 4, kind: input, shape index: {}]
  %s5 = inlined_call_operand.hbm [shape: bf16[256,128], index: 5, kind: input, shape index: {}]
  %s6 = inlined_call_operand.vmem [shape: f32[1,128], index: 6, kind: input, shape index: {}]
  %s7 = inlined_call_operand.hbm [shape: f32[24,128], index: 7, kind: output, shape index: {}]
  %s8 = sld [smem:[#allocation0]]
  $region50: #{matching_model_forward.1} parent=0
    _
  %s10 = ssub.s32 1, %s8
  %s11 = scalar_select 0, %s10, %s8
  $region1: #{matching_model_forward.1} parent=0
    #allocation2 [shape = 'u8[262144]{0}', space=vmem, size = 0x40000, scoped, tag = 'input window, operand 1, single buffered']
    #allocation3 [shape = 's32[1]{0}', space=sflag, size = 0x4, scoped, tag = 'scoped memory for matching_model_forward.1']
    #allocation4 [shape = 's32[1]{0}', space=sflag, size = 0x4, scoped, tag = 'scoped memory for matching_model_forward.1']
    #allocation5 [shape = 'u8[524288]{0}', space=vmem, size = 0x80000, scoped, tag = 'input window, operand 3, single buffered']
    #allocation6 [shape = 's32[1]{0}', space=sflag, size = 0x4, scoped, tag = 'scoped memory for matching_model_forward.1']
    #allocation7 [shape = 'u8[65536]{0}', space=vmem, size = 0x10000, scoped, tag = 'input window, operand 5, single buffered']
    #allocation8 [shape = 'u8[12288]{0}', space=vmem, size = 0x3000, scoped, tag = 'output window, operand 0, single buffered']
    %12 = vsyncpa [#allocation3], 0
    %13 = vsyncpa [#allocation6], 0
    %14 = vsyncpa [#allocation4], 0
    // Predicated region
    $region2: #{matching_model_forward.1} parent=1 // pred_check
      _
    $region3: #{matching_model_forward.1} parent=1 // pred_check_branch
      %16 = sbr.rel (0) target = $region5
    $region4: #{matching_model_forward.1} parent=1 // pred_region
      _
    $region5: #{matching_model_forward.1} parent=1 // pred_fallthru
      _
    // Predicated region
    $region6: #{matching_model_forward.1} parent=1 // pred_check
      _
    $region7: #{matching_model_forward.1} parent=1 // pred_check_branch
      %18 = sbr.rel (0) target = $region9
    $region8: #{matching_model_forward.1} parent=1 // pred_region
      %s20 = ssub.s32 8192, 8192
      %21 = vsyncadd [#allocation3], %s20
      %s22 = sshll.u32 [#allocation2], 4
      %s23 = int_to_ptr.vmem [resolvable:$true] %s22
      %28 = dma.hbm_to_vmem [thread:$0]  %s1, 8192, %s23, [#allocation3], 512, 512, 32
    $region9: #{matching_model_forward.1} parent=1 // pred_fallthru
      _
    // Predicated region
    $region10: #{matching_model_forward.1} parent=1 // pred_check
      _
    $region11: #{matching_model_forward.1} parent=1 // pred_check_branch
      %30 = sbr.rel (0) target = $region13
    $region12: #{matching_model_forward.1} parent=1 // pred_region
      _
    $region13: #{matching_model_forward.1} parent=1 // pred_fallthru
      _
    // Predicated region
    $region14: #{matching_model_forward.1} parent=1 // pred_check
      _
    $region15: #{matching_model_forward.1} parent=1 // pred_check_branch
      %32 = sbr.rel (0) target = $region17
    $region16: #{matching_model_forward.1} parent=1 // pred_region
      %s34 = ssub.s32 16384, 16384
      %35 = vsyncadd [#allocation6], %s34
      %s36 = sshll.u32 [#allocation5], 4
      %s37 = int_to_ptr.vmem [resolvable:$true] %s36
      %42 = dma.hbm_to_vmem [thread:$0]  %s3, 16384, %s37, [#allocation6], 128, 128, 8
    $region17: #{matching_model_forward.1} parent=1 // pred_fallthru
      _
    // Predicated region
    $region18: #{matching_model_forward.1} parent=1 // pred_check
      _
    $region19: #{matching_model_forward.1} parent=1 // pred_check_branch
      %44 = sbr.rel (0) target = $region21
    $region20: #{matching_model_forward.1} parent=1 // pred_region
      _
    $region21: #{matching_model_forward.1} parent=1 // pred_fallthru
      _
    // Predicated region
    $region22: #{matching_model_forward.1} parent=1 // pred_check
      _
    $region23: #{matching_model_forward.1} parent=1 // pred_check_branch
      %46 = sbr.rel (0) target = $region25
    $region24: #{matching_model_forward.1} parent=1 // pred_region
      %s48 = ssub.s32 2048, 2048
      %49 = vsyncadd [#allocation6], %s48
      %s50 = sshll.u32 [#allocation7], 4
      %s51 = int_to_ptr.vmem [resolvable:$true] %s50
      %56 = dma.hbm_to_vmem [thread:$0]  %s5, 2048, %s51, [#allocation6], 64, 64, 4
    $region25: #{matching_model_forward.1} parent=1 // pred_fallthru
      _
    // Predicated region
    $region26: #{matching_model_forward.1} parent=1 // pred_check
      _
    $region27: #{matching_model_forward.1} parent=1 // pred_check_branch
      %58 = sbr.rel (0) target = $region29
    $region28: #{matching_model_forward.1} parent=1 // pred_region
      _
    $region29: #{matching_model_forward.1} parent=1 // pred_fallthru
      _
    // Predicated region
    $region30: #{matching_model_forward.1} parent=1 // pred_check
      _
    $region31: #{matching_model_forward.1} parent=1 // pred_check_branch
      %60 = sbr.rel (0) target = $region33
    $region32: #{matching_model_forward.1} parent=1 // pred_region
      %61 = dma.done [#allocation3], 8192
    $region33: #{matching_model_forward.1} parent=1 // pred_fallthru
      _
    // Predicated region
    $region34: #{matching_model_forward.1} parent=1 // pred_check
      _
    $region35: #{matching_model_forward.1} parent=1 // pred_check_branch
      %63 = sbr.rel (0) target = $region37
    $region36: #{matching_model_forward.1} parent=1 // pred_region
      %64 = dma.done [#allocation6], 16384
    $region37: #{matching_model_forward.1} parent=1 // pred_fallthru
      _
    // Predicated region
    $region38: #{matching_model_forward.1} parent=1 // pred_check
      _
    $region39: #{matching_model_forward.1} parent=1 // pred_check_branch
      %66 = sbr.rel (0) target = $region41
    $region40: #{matching_model_forward.1} parent=1 // pred_region
      %67 = dma.done [#allocation6], 2048
    $region41: #{matching_model_forward.1} parent=1 // pred_fallthru
      _
    %v69 = vld [vmem:[%s0] sm:$0xff]
    %v70 = vld [vmem:[%s0 + $0x8] sm:$0xff]
    %v71 = vld [vmem:[%s0 + $0x10] sm:$0xff]
    %v72 = vpack.c.bf16 %v70, %v69
    %v73 = vpack.c.bf16 %v71, %v71
    %v74 = vld [vmem:[#allocation2] sm:$0xff]
    %v75 = vld [vmem:[#allocation2 + $0x8] sm:$0xff]
    %v76 = vld [vmem:[#allocation2 + $0x10] sm:$0xff]
    %v77 = vld [vmem:[#allocation2 + $0x18] sm:$0xff]
    %v78 = vld [vmem:[#allocation2 + $0x20] sm:$0xff]
    %v79 = vld [vmem:[#allocation2 + $0x28] sm:$0xff]
    %v80 = vld [vmem:[#allocation2 + $0x30] sm:$0xff]
    %v81 = vld [vmem:[#allocation2 + $0x38] sm:$0xff]
    %v82 = vld [vmem:[#allocation2 + $0x40] sm:$0xff]
    %v83 = vld [vmem:[#allocation2 + $0x48] sm:$0xff]
    %v84 = vld [vmem:[#allocation2 + $0x50] sm:$0xff]
    %v85 = vld [vmem:[#allocation2 + $0x58] sm:$0xff]
    %v86 = vld [vmem:[#allocation2 + $0x60] sm:$0xff]
    %v87 = vld [vmem:[#allocation2 + $0x68] sm:$0xff]
    %v88 = vld [vmem:[#allocation2 + $0x70] sm:$0xff]
    %v89 = vld [vmem:[#allocation2 + $0x78] sm:$0xff]
    %v90 = vld [vmem:[#allocation2 + $0x80] sm:$0xff]
    %v91 = vld [vmem:[#allocation2 + $0x88] sm:$0xff]
    %v92 = vld [vmem:[#allocation2 + $0x90] sm:$0xff]
    %v93 = vld [vmem:[#allocation2 + $0x98] sm:$0xff]
    %v94 = vld [vmem:[#allocation2 + $0xa0] sm:$0xff]
    %v95 = vld [vmem:[#allocation2 + $0xa8] sm:$0xff]
    %v96 = vld [vmem:[#allocation2 + $0xb0] sm:$0xff]
    %v97 = vld [vmem:[#allocation2 + $0xb8] sm:$0xff]
    %v98 = vld [vmem:[#allocation2 + $0xc0] sm:$0xff]
    %v99 = vld [vmem:[#allocation2 + $0xc8] sm:$0xff]
    %v100 = vld [vmem:[#allocation2 + $0xd0] sm:$0xff]
    %v101 = vld [vmem:[#allocation2 + $0xd8] sm:$0xff]
    %v102 = vld [vmem:[#allocation2 + $0xe0] sm:$0xff]
    %v103 = vld [vmem:[#allocation2 + $0xe8] sm:$0xff]
    %v104 = vld [vmem:[#allocation2 + $0xf0] sm:$0xff]
    %v105 = vld [vmem:[#allocation2 + $0xf8] sm:$0xff]
    %v106 = vld [vmem:[#allocation2 + $0x100] sm:$0xff]
    %v107 = vld [vmem:[#allocation2 + $0x108] sm:$0xff]
    %v108 = vld [vmem:[#allocation2 + $0x110] sm:$0xff]
    %v109 = vld [vmem:[#allocation2 + $0x118] sm:$0xff]
    %v110 = vld [vmem:[#allocation2 + $0x120] sm:$0xff]
    %v111 = vld [vmem:[#allocation2 + $0x128] sm:$0xff]
    %v112 = vld [vmem:[#allocation2 + $0x130] sm:$0xff]
    %v113 = vld [vmem:[#allocation2 + $0x138] sm:$0xff]
    %v114 = vld [vmem:[#allocation2 + $0x140] sm:$0xff]
    %v115 = vld [vmem:[#allocation2 + $0x148] sm:$0xff]
    %v116 = vld [vmem:[#allocation2 + $0x150] sm:$0xff]
    %v117 = vld [vmem:[#allocation2 + $0x158] sm:$0xff]
    %v118 = vld [vmem:[#allocation2 + $0x160] sm:$0xff]
    %v119 = vld [vmem:[#allocation2 + $0x168] sm:$0xff]
    %v120 = vld [vmem:[#allocation2 + $0x170] sm:$0xff]
    %v121 = vld [vmem:[#allocation2 + $0x178] sm:$0xff]
    %v122 = vld [vmem:[#allocation2 + $0x180] sm:$0xff]
    %v123 = vld [vmem:[#allocation2 + $0x188] sm:$0xff]
    %v124 = vld [vmem:[#allocation2 + $0x190] sm:$0xff]
    %v125 = vld [vmem:[#allocation2 + $0x198] sm:$0xff]
    %v126 = vld [vmem:[#allocation2 + $0x1a0] sm:$0xff]
    %v127 = vld [vmem:[#allocation2 + $0x1a8] sm:$0xff]
    %v128 = vld [vmem:[#allocation2 + $0x1b0] sm:$0xff]
    %v129 = vld [vmem:[#allocation2 + $0x1b8] sm:$0xff]
    %v130 = vld [vmem:[#allocation2 + $0x1c0] sm:$0xff]
    %v131 = vld [vmem:[#allocation2 + $0x1c8] sm:$0xff]
    %v132 = vld [vmem:[#allocation2 + $0x1d0] sm:$0xff]
    %v133 = vld [vmem:[#allocation2 + $0x1d8] sm:$0xff]
    %v134 = vld [vmem:[#allocation2 + $0x1e0] sm:$0xff]
    %v135 = vld [vmem:[#allocation2 + $0x1e8] sm:$0xff]
    %v136 = vld [vmem:[#allocation2 + $0x1f0] sm:$0xff]
    %v137 = vld [vmem:[#allocation2 + $0x1f8] sm:$0xff]
    %v138 = vld [vmem:[%s2] sm:$0xff]
    %v140 = vlaneseq
    %v141 = vshrl.u32 %v140, 7
    %v142 = vsub.s32 0, %v141
    %v143 = vrot.slane %v138, %v142
    %v144 = vlaneseq
    %v145 = vshrl.u32 %v144, 7
    %v146 = vsub.s32 1, %v145
    %v147 = vrot.slane %v138, %v146
    %v148 = vlaneseq
    %v149 = vshrl.u32 %v148, 7
    %v150 = vsub.s32 2, %v149
    %v151 = vrot.slane %v138, %v150
    %v152 = vlaneseq
    %v153 = vshrl.u32 %v152, 7
    %v154 = vsub.s32 3, %v153
    %v155 = vrot.slane %v138, %v154
    %v156 = vlaneseq
    %v157 = vshrl.u32 %v156, 7
    %v158 = vsub.s32 4, %v157
    %v159 = vrot.slane %v138, %v158
    %v160 = vlaneseq
    %v161 = vshrl.u32 %v160, 7
    %v162 = vsub.s32 5, %v161
    %v163 = vrot.slane %v138, %v162
    %v164 = vlaneseq
    %v165 = vshrl.u32 %v164, 7
    %v166 = vsub.s32 6, %v165
    %v167 = vrot.slane %v138, %v166
    %v168 = vlaneseq
    %v169 = vshrl.u32 %v168, 7
    %v170 = vsub.s32 7, %v169
    %v171 = vrot.slane %v138, %v170
    %v244 = vunpack.c.l.b16 %v74
    %v245 = vunpack.c.h.b16 %v74
    %v246 = vunpack.c.l.b16 %v75
    %v247 = vunpack.c.h.b16 %v75
    %v248 = vunpack.c.l.b16 %v76
    %v249 = vunpack.c.h.b16 %v76
    %v250 = vunpack.c.l.b16 %v77
    %v251 = vunpack.c.h.b16 %v77
    %v252 = vunpack.c.l.b16 %v78
    %v253 = vunpack.c.h.b16 %v78
    %v254 = vunpack.c.l.b16 %v79
    %v255 = vunpack.c.h.b16 %v79
    %v256 = vunpack.c.l.b16 %v80
    %v257 = vunpack.c.h.b16 %v80
    %v258 = vunpack.c.l.b16 %v81
    %v259 = vunpack.c.h.b16 %v81
    %v260 = vunpack.c.l.b16 %v82
    %v261 = vunpack.c.h.b16 %v82
    %v262 = vunpack.c.l.b16 %v83
    %v263 = vunpack.c.h.b16 %v83
    %v264 = vunpack.c.l.b16 %v84
    %v265 = vunpack.c.h.b16 %v84
    %v266 = vunpack.c.l.b16 %v85
    %v267 = vunpack.c.h.b16 %v85
    %v268 = vunpack.c.l.b16 %v86
    %v269 = vunpack.c.h.b16 %v86
    %v270 = vunpack.c.l.b16 %v87
    %v271 = vunpack.c.h.b16 %v87
    %v272 = vunpack.c.l.b16 %v88
    %v273 = vunpack.c.h.b16 %v88
    %v274 = vunpack.c.l.b16 %v89
    %v275 = vunpack.c.h.b16 %v89
    %v276 = vunpack.c.l.b16 %v90
    %v277 = vunpack.c.h.b16 %v90
    %v278 = vunpack.c.l.b16 %v91
    %v279 = vunpack.c.h.b16 %v91
    %v280 = vunpack.c.l.b16 %v92
    %v281 = vunpack.c.h.b16 %v92
    %v282 = vunpack.c.l.b16 %v93
    %v283 = vunpack.c.h.b16 %v93
    %v284 = vunpack.c.l.b16 %v94
    %v285 = vunpack.c.h.b16 %v94
    %v286 = vunpack.c.l.b16 %v95
    %v287 = vunpack.c.h.b16 %v95
    %v288 = vunpack.c.l.b16 %v96
    %v289 = vunpack.c.h.b16 %v96
    %v290 = vunpack.c.l.b16 %v97
    %v291 = vunpack.c.h.b16 %v97
    %v292 = vunpack.c.l.b16 %v98
    %v293 = vunpack.c.h.b16 %v98
    %v294 = vunpack.c.l.b16 %v99
    %v295 = vunpack.c.h.b16 %v99
    %v296 = vunpack.c.l.b16 %v100
    %v297 = vunpack.c.h.b16 %v100
    %v298 = vunpack.c.l.b16 %v101
    %v299 = vunpack.c.h.b16 %v101
    %v300 = vunpack.c.l.b16 %v102
    %v301 = vunpack.c.h.b16 %v102
    %v302 = vunpack.c.l.b16 %v103
    %v303 = vunpack.c.h.b16 %v103
    %v304 = vunpack.c.l.b16 %v104
    %v305 = vunpack.c.h.b16 %v104
    %v306 = vunpack.c.l.b16 %v105
    %v307 = vunpack.c.h.b16 %v105
    %v308 = vunpack.c.l.b16 %v106
    %v309 = vunpack.c.h.b16 %v106
    %v310 = vunpack.c.l.b16 %v107
    %v311 = vunpack.c.h.b16 %v107
    %v312 = vunpack.c.l.b16 %v108
    %v313 = vunpack.c.h.b16 %v108
    %v314 = vunpack.c.l.b16 %v109
    %v315 = vunpack.c.h.b16 %v109
    %v316 = vunpack.c.l.b16 %v110
    %v317 = vunpack.c.h.b16 %v110
    %v318 = vunpack.c.l.b16 %v111
    %v319 = vunpack.c.h.b16 %v111
    %v320 = vunpack.c.l.b16 %v112
    %v321 = vunpack.c.h.b16 %v112
    %v322 = vunpack.c.l.b16 %v113
    %v323 = vunpack.c.h.b16 %v113
    %v324 = vunpack.c.l.b16 %v114
    %v325 = vunpack.c.h.b16 %v114
    %v326 = vunpack.c.l.b16 %v115
    %v327 = vunpack.c.h.b16 %v115
    %v328 = vunpack.c.l.b16 %v116
    %v329 = vunpack.c.h.b16 %v116
    %v330 = vunpack.c.l.b16 %v117
    %v331 = vunpack.c.h.b16 %v117
    %v332 = vunpack.c.l.b16 %v118
    %v333 = vunpack.c.h.b16 %v118
    %v334 = vunpack.c.l.b16 %v119
    %v335 = vunpack.c.h.b16 %v119
    %v336 = vunpack.c.l.b16 %v120
    %v337 = vunpack.c.h.b16 %v120
    %v338 = vunpack.c.l.b16 %v121
    %v339 = vunpack.c.h.b16 %v121
    %v340 = vunpack.c.l.b16 %v122
    %v341 = vunpack.c.h.b16 %v122
    %v342 = vunpack.c.l.b16 %v123
    %v343 = vunpack.c.h.b16 %v123
    %v344 = vunpack.c.l.b16 %v124
    %v345 = vunpack.c.h.b16 %v124
    %v346 = vunpack.c.l.b16 %v125
    %v347 = vunpack.c.h.b16 %v125
    %v348 = vunpack.c.l.b16 %v126
    %v349 = vunpack.c.h.b16 %v126
    %v350 = vunpack.c.l.b16 %v127
    %v351 = vunpack.c.h.b16 %v127
    %v352 = vunpack.c.l.b16 %v128
    %v353 = vunpack.c.h.b16 %v128
    %v354 = vunpack.c.l.b16 %v129
    %v355 = vunpack.c.h.b16 %v129
    %v356 = vunpack.c.l.b16 %v130
    %v357 = vunpack.c.h.b16 %v130
    %v358 = vunpack.c.l.b16 %v131
    %v359 = vunpack.c.h.b16 %v131
    %v360 = vunpack.c.l.b16 %v132
    %v361 = vunpack.c.h.b16 %v132
    %v362 = vunpack.c.l.b16 %v133
    %v363 = vunpack.c.h.b16 %v133
    %v364 = vunpack.c.l.b16 %v134
    %v365 = vunpack.c.h.b16 %v134
    %v366 = vunpack.c.l.b16 %v135
    %v367 = vunpack.c.h.b16 %v135
    %v368 = vunpack.c.l.b16 %v136
    %v369 = vunpack.c.h.b16 %v136
    %v370 = vunpack.c.l.b16 %v137
    %v371 = vunpack.c.h.b16 %v137
    %v372 = vpack.c.b16 %v252, %v244
    %v373 = vpack.c.b16 %v253, %v245
    %v374 = vpack.c.b16 %v254, %v246
    %v375 = vpack.c.b16 %v255, %v247
    %v376 = vpack.c.b16 %v256, %v248
    %v377 = vpack.c.b16 %v257, %v249
    %v378 = vpack.c.b16 %v258, %v250
    %v379 = vpack.c.b16 %v259, %v251
    %v380 = vpack.c.b16 %v268, %v260
    %v381 = vpack.c.b16 %v269, %v261
    %v382 = vpack.c.b16 %v270, %v262
    %v383 = vpack.c.b16 %v271, %v263
    %v384 = vpack.c.b16 %v272, %v264
    %v385 = vpack.c.b16 %v273, %v265
    %v386 = vpack.c.b16 %v274, %v266
    %v387 = vpack.c.b16 %v275, %v267
    %v388 = vpack.c.b16 %v284, %v276
    %v389 = vpack.c.b16 %v285, %v277
    %v390 = vpack.c.b16 %v286, %v278
    %v391 = vpack.c.b16 %v287, %v279
    %v392 = vpack.c.b16 %v288, %v280
    %v393 = vpack.c.b16 %v289, %v281
    %v394 = vpack.c.b16 %v290, %v282
    %v395 = vpack.c.b16 %v291, %v283
    %v396 = vpack.c.b16 %v300, %v292
    %v397 = vpack.c.b16 %v301, %v293
    %v398 = vpack.c.b16 %v302, %v294
    %v399 = vpack.c.b16 %v303, %v295
    %v400 = vpack.c.b16 %v304, %v296
    %v401 = vpack.c.b16 %v305, %v297
    %v402 = vpack.c.b16 %v306, %v298
    %v403 = vpack.c.b16 %v307, %v299
    %v404 = vpack.c.b16 %v316, %v308
    %v405 = vpack.c.b16 %v317, %v309
    %v406 = vpack.c.b16 %v318, %v310
    %v407 = vpack.c.b16 %v319, %v311
    %v408 = vpack.c.b16 %v320, %v312
    %v409 = vpack.c.b16 %v321, %v313
    %v410 = vpack.c.b16 %v322, %v314
    %v411 = vpack.c.b16 %v323, %v315
    %v412 = vpack.c.b16 %v332, %v324
    %v413 = vpack.c.b16 %v333, %v325
    %v414 = vpack.c.b16 %v334, %v326
    %v415 = vpack.c.b16 %v335, %v327
    %v416 = vpack.c.b16 %v336, %v328
    %v417 = vpack.c.b16 %v337, %v329
    %v418 = vpack.c.b16 %v338, %v330
    %v419 = vpack.c.b16 %v339, %v331
    %v420 = vpack.c.b16 %v348, %v340
    %v421 = vpack.c.b16 %v349, %v341
    %v422 = vpack.c.b16 %v350, %v342
    %v423 = vpack.c.b16 %v351, %v343
    %v424 = vpack.c.b16 %v352, %v344
    %v425 = vpack.c.b16 %v353, %v345
    %v426 = vpack.c.b16 %v354, %v346
    %v427 = vpack.c.b16 %v355, %v347
    %v428 = vpack.c.b16 %v364, %v356
    %v429 = vpack.c.b16 %v365, %v357
    %v430 = vpack.c.b16 %v366, %v358
    %v431 = vpack.c.b16 %v367, %v359
    %v432 = vpack.c.b16 %v368, %v360
    %v433 = vpack.c.b16 %v369, %v361
    %v434 = vpack.c.b16 %v370, %v362
    %v435 = vpack.c.b16 %v371, %v363
    %500 = vmatprep.subr.bf16.mxu0 %v429
    %501 = vmatpush1.bf16.msra.mxu0 %v428
    %502 = vmatprep.subr.bf16.mxu0 %v421
    %503 = vmatpush1.bf16.msra.mxu0 %v420
    %504 = vmatprep.subr.bf16.mxu0 %v413
    %505 = vmatpush1.bf16.msra.mxu0 %v412
    %506 = vmatprep.subr.bf16.mxu0 %v405
    %507 = vmatpush1.bf16.msra.mxu0 %v404
    %508 = vmatprep.subr.bf16.mxu0 %v397
    %509 = vmatpush1.bf16.msra.mxu0 %v396
    %510 = vmatprep.subr.bf16.mxu0 %v389
    %511 = vmatpush1.bf16.msra.mxu0 %v388
    %512 = vmatprep.subr.bf16.mxu0 %v381
    %513 = vmatpush1.bf16.msra.mxu0 %v380
    %514 = vmatprep.subr.bf16.mxu0 %v373
    %515 = vmatpush1.bf16.msra.mxu0 %v372
    %516 = vmatprep.subr.bf16.mxu0 0
    %517 = vmatpush2.bf16.msra.mxu0 0
    %518 = vmatprep.subr.bf16.mxu0 0
    %519 = vmatpush2.bf16.msra.mxu0 0
    %520 = vmatprep.subr.bf16.mxu0 0
    %521 = vmatpush2.bf16.msra.mxu0 0
    %522 = vmatprep.subr.bf16.mxu0 0
    %523 = vmatpush2.bf16.msra.mxu0 0
    %524 = vmatprep.subr.bf16.mxu0 0
    %525 = vmatpush2.bf16.msra.mxu0 0
    %526 = vmatprep.subr.bf16.mxu0 0
    %527 = vmatpush2.bf16.msra.mxu0 0
    %528 = vmatprep.subr.bf16.mxu0 0
    %529 = vmatpush2.bf16.msra.mxu0 0
    %530 = vmatprep.subr.bf16.mxu0 0
    %531 = vmatpush2.bf16.msra.mxu0 0
    %532 = vmatprep.mubr.bf16.mxu0 0
    %533 = vmatmul.mubr.bf16.gmra.mxu0 %v72
    %v534 = vpop.f32.mrf.mxu0
    %v535 = vadd.f32 %v143, %v534
    %v536 = vpop.f32.mrf.mxu0
    %v537 = vadd.f32 %v147, %v536
    %v538 = vpop.f32.mrf.mxu0
    %v539 = vadd.f32 %v143, %v538
    %v540 = vpop.f32.mrf.mxu0
    %v541 = vadd.f32 %v147, %v540
    %542 = vmatprep.mubr.bf16.mxu0 0
    %543 = vmatmul.mubr.bf16.gmra.mxu0 %v73
    %v544 = vpop.f32.mrf.mxu0
    %v545 = vadd.f32 %v143, %v544
    %v546 = vpop.f32.mrf.mxu0
    %v547 = vadd.f32 %v147, %v546
    %v548 = vpop.f32.mrf.mxu0
    %v549 = vpop.f32.mrf.mxu0
    %550 = vdwg.mxu0
    %551 = vmatprep.subr.bf16.mxu0 %v431
    %552 = vmatpush1.bf16.msra.mxu0 %v430
    %553 = vmatprep.subr.bf16.mxu0 %v423
    %554 = vmatpush1.bf16.msra.mxu0 %v422
    %555 = vmatprep.subr.bf16.mxu0 %v415
    %556 = vmatpush1.bf16.msra.mxu0 %v414
    %557 = vmatprep.subr.bf16.mxu0 %v407
    %558 = vmatpush1.bf16.msra.mxu0 %v406
    %559 = vmatprep.subr.bf16.mxu0 %v399
    %560 = vmatpush1.bf16.msra.mxu0 %v398
    %561 = vmatprep.subr.bf16.mxu0 %v391
    %562 = vmatpush1.bf16.msra.mxu0 %v390
    %563 = vmatprep.subr.bf16.mxu0 %v383
    %564 = vmatpush1.bf16.msra.mxu0 %v382
    %565 = vmatprep.subr.bf16.mxu0 %v375
    %566 = vmatpush1.bf16.msra.mxu0 %v374
    %567 = vmatprep.subr.bf16.mxu0 0
    %568 = vmatpush2.bf16.msra.mxu0 0
    %569 = vmatprep.subr.bf16.mxu0 0
    %570 = vmatpush2.bf16.msra.mxu0 0
    %571 = vmatprep.subr.bf16.mxu0 0
    %572 = vmatpush2.bf16.msra.mxu0 0
    %573 = vmatprep.subr.bf16.mxu0 0
    %574 = vmatpush2.bf16.msra.mxu0 0
    %575 = vmatprep.subr.bf16.mxu0 0
    %576 = vmatpush2.bf16.msra.mxu0 0
    %577 = vmatprep.subr.bf16.mxu0 0
    %578 = vmatpush2.bf16.msra.mxu0 0
    %579 = vmatprep.subr.bf16.mxu0 0
    %580 = vmatpush2.bf16.msra.mxu0 0
    %581 = vmatprep.subr.bf16.mxu0 0
    %582 = vmatpush2.bf16.msra.mxu0 0
    %583 = vmatprep.mubr.bf16.mxu0 0
    %584 = vmatmul.mubr.bf16.gmra.mxu0 %v72
    %v585 = vpop.f32.mrf.mxu0
    %v586 = vadd.f32 %v151, %v585
    %v587 = vpop.f32.mrf.mxu0
    %v588 = vadd.f32 %v155, %v587
    %v589 = vpop.f32.mrf.mxu0
    %v590 = vadd.f32 %v151, %v589
    %v591 = vpop.f32.mrf.mxu0
    %v592 = vadd.f32 %v155, %v591
    %593 = vmatprep.mubr.bf16.mxu0 0
    %594 = vmatmul.mubr.bf16.gmra.mxu0 %v73
    %v595 = vpop.f32.mrf.mxu0
    %v596 = vadd.f32 %v151, %v595
    %v597 = vpop.f32.mrf.mxu0
    %v598 = vadd.f32 %v155, %v597
    %v599 = vpop.f32.mrf.mxu0
    %v600 = vpop.f32.mrf.mxu0
    %601 = vdwg.mxu0
    %602 = vmatprep.subr.bf16.mxu0 %v433
    %603 = vmatpush1.bf16.msra.mxu0 %v432
    %604 = vmatprep.subr.bf16.mxu0 %v425
    %605 = vmatpush1.bf16.msra.mxu0 %v424
    %606 = vmatprep.subr.bf16.mxu0 %v417
    %607 = vmatpush1.bf16.msra.mxu0 %v416
    %608 = vmatprep.subr.bf16.mxu0 %v409
    %609 = vmatpush1.bf16.msra.mxu0 %v408
    %610 = vmatprep.subr.bf16.mxu0 %v401
    %611 = vmatpush1.bf16.msra.mxu0 %v400
    %612 = vmatprep.subr.bf16.mxu0 %v393
    %613 = vmatpush1.bf16.msra.mxu0 %v392
    %614 = vmatprep.subr.bf16.mxu0 %v385
    %615 = vmatpush1.bf16.msra.mxu0 %v384
    %616 = vmatprep.subr.bf16.mxu0 %v377
    %617 = vmatpush1.bf16.msra.mxu0 %v376
    %618 = vmatprep.subr.bf16.mxu0 0
    %619 = vmatpush2.bf16.msra.mxu0 0
    %620 = vmatprep.subr.bf16.mxu0 0
    %621 = vmatpush2.bf16.msra.mxu0 0
    %622 = vmatprep.subr.bf16.mxu0 0
    %623 = vmatpush2.bf16.msra.mxu0 0
    %624 = vmatprep.subr.bf16.mxu0 0
    %625 = vmatpush2.bf16.msra.mxu0 0
    %626 = vmatprep.subr.bf16.mxu0 0
    %627 = vmatpush2.bf16.msra.mxu0 0
    %628 = vmatprep.subr.bf16.mxu0 0
    %629 = vmatpush2.bf16.msra.mxu0 0
    %630 = vmatprep.subr.bf16.mxu0 0
    %631 = vmatpush2.bf16.msra.mxu0 0
    %632 = vmatprep.subr.bf16.mxu0 0
    %633 = vmatpush2.bf16.msra.mxu0 0
    %634 = vmatprep.mubr.bf16.mxu0 0
    %635 = vmatmul.mubr.bf16.gmra.mxu0 %v72
    %v636 = vpop.f32.mrf.mxu0
    %v637 = vadd.f32 %v159, %v636
    %v638 = vpop.f32.mrf.mxu0
    %v639 = vadd.f32 %v163, %v638
    %v640 = vpop.f32.mrf.mxu0
    %v641 = vadd.f32 %v159, %v640
    %v642 = vpop.f32.mrf.mxu0
    %v643 = vadd.f32 %v163, %v642
    %644 = vmatprep.mubr.bf16.mxu0 0
    %645 = vmatmul.mubr.bf16.gmra.mxu0 %v73
    %v646 = vpop.f32.mrf.mxu0
    %v647 = vadd.f32 %v159, %v646
    %v648 = vpop.f32.mrf.mxu0
    %v649 = vadd.f32 %v163, %v648
    %v650 = vpop.f32.mrf.mxu0
    %v651 = vpop.f32.mrf.mxu0
    %652 = vdwg.mxu0
    %653 = vmatprep.subr.bf16.mxu0 %v435
    %654 = vmatpush1.bf16.msra.mxu0 %v434
    %655 = vmatprep.subr.bf16.mxu0 %v427
    %656 = vmatpush1.bf16.msra.mxu0 %v426
    %657 = vmatprep.subr.bf16.mxu0 %v419
    %658 = vmatpush1.bf16.msra.mxu0 %v418
    %659 = vmatprep.subr.bf16.mxu0 %v411
    %660 = vmatpush1.bf16.msra.mxu0 %v410
    %661 = vmatprep.subr.bf16.mxu0 %v403
    %662 = vmatpush1.bf16.msra.mxu0 %v402
    %663 = vmatprep.subr.bf16.mxu0 %v395
    %664 = vmatpush1.bf16.msra.mxu0 %v394
    %665 = vmatprep.subr.bf16.mxu0 %v387
    %666 = vmatpush1.bf16.msra.mxu0 %v386
    %667 = vmatprep.subr.bf16.mxu0 %v379
    %668 = vmatpush1.bf16.msra.mxu0 %v378
    %669 = vmatprep.subr.bf16.mxu0 0
    %670 = vmatpush2.bf16.msra.mxu0 0
    %671 = vmatprep.subr.bf16.mxu0 0
    %672 = vmatpush2.bf16.msra.mxu0 0
    %673 = vmatprep.subr.bf16.mxu0 0
    %674 = vmatpush2.bf16.msra.mxu0 0
    %675 = vmatprep.subr.bf16.mxu0 0
    %676 = vmatpush2.bf16.msra.mxu0 0
    %677 = vmatprep.subr.bf16.mxu0 0
    %678 = vmatpush2.bf16.msra.mxu0 0
    %679 = vmatprep.subr.bf16.mxu0 0
    %680 = vmatpush2.bf16.msra.mxu0 0
    %681 = vmatprep.subr.bf16.mxu0 0
    %682 = vmatpush2.bf16.msra.mxu0 0
    %683 = vmatprep.subr.bf16.mxu0 0
    %684 = vmatpush2.bf16.msra.mxu0 0
    %685 = vmatprep.mubr.bf16.mxu0 0
    %686 = vmatmul.mubr.bf16.gmra.mxu0 %v72
    %v687 = vpop.f32.mrf.mxu0
    %v688 = vadd.f32 %v167, %v687
    %v689 = vpop.f32.mrf.mxu0
    %v690 = vadd.f32 %v171, %v689
    %v691 = vpop.f32.mrf.mxu0
    %v692 = vadd.f32 %v167, %v691
    %v693 = vpop.f32.mrf.mxu0
    %v694 = vadd.f32 %v171, %v693
    %695 = vmatprep.mubr.bf16.mxu0 0
    %696 = vmatmul.mubr.bf16.gmra.mxu0 %v73
    %v697 = vpop.f32.mrf.mxu0
    %v698 = vadd.f32 %v167, %v697
    %v699 = vpop.f32.mrf.mxu0
    %v700 = vadd.f32 %v171, %v699
    %v701 = vpop.f32.mrf.mxu0
    %v702 = vpop.f32.mrf.mxu0
    %703 = vdwg.mxu0
    %v704 = vmul.f32 %v535, 0.5
    %v705 = vmul.f32 %v537, 0.5
    %v706 = vmul.f32 %v586, 0.5
    %v707 = vmul.f32 %v588, 0.5
    %v708 = vmul.f32 %v637, 0.5
    %v709 = vmul.f32 %v639, 0.5
    %v710 = vmul.f32 %v688, 0.5
    %v711 = vmul.f32 %v690, 0.5
    %v712 = vmul.f32 %v539, 0.5
    %v713 = vmul.f32 %v541, 0.5
    %v714 = vmul.f32 %v590, 0.5
    %v715 = vmul.f32 %v592, 0.5
    %v716 = vmul.f32 %v641, 0.5
    %v717 = vmul.f32 %v643, 0.5
    %v718 = vmul.f32 %v692, 0.5
    %v719 = vmul.f32 %v694, 0.5
    %v720 = vmul.f32 %v545, 0.5
    %v721 = vmul.f32 %v547, 0.5
    %v722 = vmul.f32 %v596, 0.5
    %v723 = vmul.f32 %v598, 0.5
    %v724 = vmul.f32 %v647, 0.5
    %v725 = vmul.f32 %v649, 0.5
    %v726 = vmul.f32 %v698, 0.5
    %v727 = vmul.f32 %v700, 0.5
    %v728 = vmul.f32 %v535, 0.044715
    %v729 = vmul.f32 %v537, 0.044715
    %v730 = vmul.f32 %v586, 0.044715
    %v731 = vmul.f32 %v588, 0.044715
    %v732 = vmul.f32 %v637, 0.044715
    %v733 = vmul.f32 %v639, 0.044715
    %v734 = vmul.f32 %v688, 0.044715
    %v735 = vmul.f32 %v690, 0.044715
    %v736 = vmul.f32 %v539, 0.044715
    %v737 = vmul.f32 %v541, 0.044715
    %v738 = vmul.f32 %v590, 0.044715
    %v739 = vmul.f32 %v592, 0.044715
    %v740 = vmul.f32 %v641, 0.044715
    %v741 = vmul.f32 %v643, 0.044715
    %v742 = vmul.f32 %v692, 0.044715
    %v743 = vmul.f32 %v694, 0.044715
    %v744 = vmul.f32 %v545, 0.044715
    %v745 = vmul.f32 %v547, 0.044715
    %v746 = vmul.f32 %v596, 0.044715
    %v747 = vmul.f32 %v598, 0.044715
    %v748 = vmul.f32 %v647, 0.044715
    %v749 = vmul.f32 %v649, 0.044715
    %v750 = vmul.f32 %v698, 0.044715
    %v751 = vmul.f32 %v700, 0.044715
    %v752 = vmul.f32 %v728, %v535
    %v753 = vmul.f32 %v729, %v537
    %v754 = vmul.f32 %v730, %v586
    %v755 = vmul.f32 %v731, %v588
    %v756 = vmul.f32 %v732, %v637
    %v757 = vmul.f32 %v733, %v639
    %v758 = vmul.f32 %v734, %v688
    %v759 = vmul.f32 %v735, %v690
    %v760 = vmul.f32 %v736, %v539
    %v761 = vmul.f32 %v737, %v541
    %v762 = vmul.f32 %v738, %v590
    %v763 = vmul.f32 %v739, %v592
    %v764 = vmul.f32 %v740, %v641
    %v765 = vmul.f32 %v741, %v643
    %v766 = vmul.f32 %v742, %v692
    %v767 = vmul.f32 %v743, %v694
    %v768 = vmul.f32 %v744, %v545
    %v769 = vmul.f32 %v745, %v547
    %v770 = vmul.f32 %v746, %v596
    %v771 = vmul.f32 %v747, %v598
    %v772 = vmul.f32 %v748, %v647
    %v773 = vmul.f32 %v749, %v649
    %v774 = vmul.f32 %v750, %v698
    %v775 = vmul.f32 %v751, %v700
    %v776 = vmul.f32 %v752, %v535
    %v777 = vmul.f32 %v753, %v537
    %v778 = vmul.f32 %v754, %v586
    %v779 = vmul.f32 %v755, %v588
    %v780 = vmul.f32 %v756, %v637
    %v781 = vmul.f32 %v757, %v639
    %v782 = vmul.f32 %v758, %v688
    %v783 = vmul.f32 %v759, %v690
    %v784 = vmul.f32 %v760, %v539
    %v785 = vmul.f32 %v761, %v541
    %v786 = vmul.f32 %v762, %v590
    %v787 = vmul.f32 %v763, %v592
    %v788 = vmul.f32 %v764, %v641
    %v789 = vmul.f32 %v765, %v643
    %v790 = vmul.f32 %v766, %v692
    %v791 = vmul.f32 %v767, %v694
    %v792 = vmul.f32 %v768, %v545
    %v793 = vmul.f32 %v769, %v547
    %v794 = vmul.f32 %v770, %v596
    %v795 = vmul.f32 %v771, %v598
    %v796 = vmul.f32 %v772, %v647
    %v797 = vmul.f32 %v773, %v649
    %v798 = vmul.f32 %v774, %v698
    %v799 = vmul.f32 %v775, %v700
    %v800 = vadd.f32 %v535, %v776
    %v801 = vadd.f32 %v537, %v777
    %v802 = vadd.f32 %v586, %v778
    %v803 = vadd.f32 %v588, %v779
    %v804 = vadd.f32 %v637, %v780
    %v805 = vadd.f32 %v639, %v781
    %v806 = vadd.f32 %v688, %v782
    %v807 = vadd.f32 %v690, %v783
    %v808 = vadd.f32 %v539, %v784
    %v809 = vadd.f32 %v541, %v785
    %v810 = vadd.f32 %v590, %v786
    %v811 = vadd.f32 %v592, %v787
    %v812 = vadd.f32 %v641, %v788
    %v813 = vadd.f32 %v643, %v789
    %v814 = vadd.f32 %v692, %v790
    %v815 = vadd.f32 %v694, %v791
    %v816 = vadd.f32 %v545, %v792
    %v817 = vadd.f32 %v547, %v793
    %v818 = vadd.f32 %v596, %v794
    %v819 = vadd.f32 %v598, %v795
    %v820 = vadd.f32 %v647, %v796
    %v821 = vadd.f32 %v649, %v797
    %v822 = vadd.f32 %v698, %v798
    %v823 = vadd.f32 %v700, %v799
    %v824 = vmul.f32 %v800, 0.7978846
    %v825 = vmul.f32 %v801, 0.7978846
    %v826 = vmul.f32 %v802, 0.7978846
    %v827 = vmul.f32 %v803, 0.7978846
    %v828 = vmul.f32 %v804, 0.7978846
    %v829 = vmul.f32 %v805, 0.7978846
    %v830 = vmul.f32 %v806, 0.7978846
    %v831 = vmul.f32 %v807, 0.7978846
    %v832 = vmul.f32 %v808, 0.7978846
    %v833 = vmul.f32 %v809, 0.7978846
    %v834 = vmul.f32 %v810, 0.7978846
    %v835 = vmul.f32 %v811, 0.7978846
    %v836 = vmul.f32 %v812, 0.7978846
    %v837 = vmul.f32 %v813, 0.7978846
    %v838 = vmul.f32 %v814, 0.7978846
    %v839 = vmul.f32 %v815, 0.7978846
    %v840 = vmul.f32 %v816, 0.7978846
    %v841 = vmul.f32 %v817, 0.7978846
    %v842 = vmul.f32 %v818, 0.7978846
    %v843 = vmul.f32 %v819, 0.7978846
    %v844 = vmul.f32 %v820, 0.7978846
    %v845 = vmul.f32 %v821, 0.7978846
    %v846 = vmul.f32 %v822, 0.7978846
    %v847 = vmul.f32 %v823, 0.7978846
    %v848 = vtanh.pop %v824
    %v849 = vtanh.pop %v825
    %v850 = vtanh.pop %v826
    %v851 = vtanh.pop %v827
    %v852 = vtanh.pop %v828
    %v853 = vtanh.pop %v829
    %v854 = vtanh.pop %v830
    %v855 = vtanh.pop %v831
    %v856 = vtanh.pop %v832
    %v857 = vtanh.pop %v833
    %v858 = vtanh.pop %v834
    %v859 = vtanh.pop %v835
    %v860 = vtanh.pop %v836
    %v861 = vtanh.pop %v837
    %v862 = vtanh.pop %v838
    %v863 = vtanh.pop %v839
    %v864 = vtanh.pop %v840
    %v865 = vtanh.pop %v841
    %v866 = vtanh.pop %v842
    %v867 = vtanh.pop %v843
    %v868 = vtanh.pop %v844
    %v869 = vtanh.pop %v845
    %v870 = vtanh.pop %v846
    %v871 = vtanh.pop %v847
    %v872 = vadd.f32 %v848, 1.0
    %v873 = vadd.f32 %v849, 1.0
    %v874 = vadd.f32 %v850, 1.0
    %v875 = vadd.f32 %v851, 1.0
    %v876 = vadd.f32 %v852, 1.0
    %v877 = vadd.f32 %v853, 1.0
    %v878 = vadd.f32 %v854, 1.0
    %v879 = vadd.f32 %v855, 1.0
    %v880 = vadd.f32 %v856, 1.0
    %v881 = vadd.f32 %v857, 1.0
    %v882 = vadd.f32 %v858, 1.0
    %v883 = vadd.f32 %v859, 1.0
    %v884 = vadd.f32 %v860, 1.0
    %v885 = vadd.f32 %v861, 1.0
    %v886 = vadd.f32 %v862, 1.0
    %v887 = vadd.f32 %v863, 1.0
    %v888 = vadd.f32 %v864, 1.0
    %v889 = vadd.f32 %v865, 1.0
    %v890 = vadd.f32 %v866, 1.0
    %v891 = vadd.f32 %v867, 1.0
    %v892 = vadd.f32 %v868, 1.0
    %v893 = vadd.f32 %v869, 1.0
    %v894 = vadd.f32 %v870, 1.0
    %v895 = vadd.f32 %v871, 1.0
    %v896 = vmul.f32 %v704, %v872
    %v897 = vmul.f32 %v705, %v873
    %v898 = vmul.f32 %v706, %v874
    %v899 = vmul.f32 %v707, %v875
    %v900 = vmul.f32 %v708, %v876
    %v901 = vmul.f32 %v709, %v877
    %v902 = vmul.f32 %v710, %v878
    %v903 = vmul.f32 %v711, %v879
    %v904 = vmul.f32 %v712, %v880
    %v905 = vmul.f32 %v713, %v881
    %v906 = vmul.f32 %v714, %v882
    %v907 = vmul.f32 %v715, %v883
    %v908 = vmul.f32 %v716, %v884
    %v909 = vmul.f32 %v717, %v885
    %v910 = vmul.f32 %v718, %v886
    %v911 = vmul.f32 %v719, %v887
    %v912 = vmul.f32 %v720, %v888
    %v913 = vmul.f32 %v721, %v889
    %v914 = vmul.f32 %v722, %v890
    %v915 = vmul.f32 %v723, %v891
    %v916 = vmul.f32 %v724, %v892
    %v917 = vmul.f32 %v725, %v893
    %v918 = vmul.f32 %v726, %v894
    %v919 = vmul.f32 %v727, %v895
    %v920 = vpack.c.bf16 %v904, %v896
    %v921 = vpack.c.bf16 %v905, %v897
    %v922 = vpack.c.bf16 %v906, %v898
    %v923 = vpack.c.bf16 %v907, %v899
    %v924 = vpack.c.bf16 %v908, %v900
    %v925 = vpack.c.bf16 %v909, %v901
    %v926 = vpack.c.bf16 %v910, %v902
    %v927 = vpack.c.bf16 %v911, %v903
    %v928 = vpack.c.bf16 %v912, %v912
    %v929 = vpack.c.bf16 %v913, %v913
    %v930 = vpack.c.bf16 %v914, %v914
    %v931 = vpack.c.bf16 %v915, %v915
    %v932 = vpack.c.bf16 %v916, %v916
    %v933 = vpack.c.bf16 %v917, %v917
    %v934 = vpack.c.bf16 %v918, %v918
    %v935 = vpack.c.bf16 %v919, %v919
    %v936 = vld [vmem:[#allocation5] sm:$0xff]
    %v937 = vld [vmem:[#allocation5 + $0x8] sm:$0xff]
    %v938 = vld [vmem:[#allocation5 + $0x10] sm:$0xff]
    %v939 = vld [vmem:[#allocation5 + $0x18] sm:$0xff]
    %v940 = vld [vmem:[#allocation5 + $0x20] sm:$0xff]
    %v941 = vld [vmem:[#allocation5 + $0x28] sm:$0xff]
    %v942 = vld [vmem:[#allocation5 + $0x30] sm:$0xff]
    %v943 = vld [vmem:[#allocation5 + $0x38] sm:$0xff]
    %v944 = vld [vmem:[#allocation5 + $0x40] sm:$0xff]
    %v945 = vld [vmem:[#allocation5 + $0x48] sm:$0xff]
    %v946 = vld [vmem:[#allocation5 + $0x50] sm:$0xff]
    %v947 = vld [vmem:[#allocation5 + $0x58] sm:$0xff]
    %v948 = vld [vmem:[#allocation5 + $0x60] sm:$0xff]
    %v949 = vld [vmem:[#allocation5 + $0x68] sm:$0xff]
    %v950 = vld [vmem:[#allocation5 + $0x70] sm:$0xff]
    %v951 = vld [vmem:[#allocation5 + $0x78] sm:$0xff]
    %v952 = vld [vmem:[#allocation5 + $0x80] sm:$0xff]
    %v953 = vld [vmem:[#allocation5 + $0x88] sm:$0xff]
    %v954 = vld [vmem:[#allocation5 + $0x90] sm:$0xff]
    %v955 = vld [vmem:[#allocation5 + $0x98] sm:$0xff]
    %v956 = vld [vmem:[#allocation5 + $0xa0] sm:$0xff]
    %v957 = vld [vmem:[#allocation5 + $0xa8] sm:$0xff]
    %v958 = vld [vmem:[#allocation5 + $0xb0] sm:$0xff]
    %v959 = vld [vmem:[#allocation5 + $0xb8] sm:$0xff]
    %v960 = vld [vmem:[#allocation5 + $0xc0] sm:$0xff]
    %v961 = vld [vmem:[#allocation5 + $0xc8] sm:$0xff]
    %v962 = vld [vmem:[#allocation5 + $0xd0] sm:$0xff]
    %v963 = vld [vmem:[#allocation5 + $0xd8] sm:$0xff]
    %v964 = vld [vmem:[#allocation5 + $0xe0] sm:$0xff]
    %v965 = vld [vmem:[#allocation5 + $0xe8] sm:$0xff]
    %v966 = vld [vmem:[#allocation5 + $0xf0] sm:$0xff]
    %v967 = vld [vmem:[#allocation5 + $0xf8] sm:$0xff]
    %v968 = vld [vmem:[#allocation5 + $0x100] sm:$0xff]
    %v969 = vld [vmem:[#allocation5 + $0x108] sm:$0xff]
    %v970 = vld [vmem:[#allocation5 + $0x110] sm:$0xff]
    %v971 = vld [vmem:[#allocation5 + $0x118] sm:$0xff]
    %v972 = vld [vmem:[#allocation5 + $0x120] sm:$0xff]
    %v973 = vld [vmem:[#allocation5 + $0x128] sm:$0xff]
    %v974 = vld [vmem:[#allocation5 + $0x130] sm:$0xff]
    %v975 = vld [vmem:[#allocation5 + $0x138] sm:$0xff]
    %v976 = vld [vmem:[#allocation5 + $0x140] sm:$0xff]
    %v977 = vld [vmem:[#allocation5 + $0x148] sm:$0xff]
    %v978 = vld [vmem:[#allocation5 + $0x150] sm:$0xff]
    %v979 = vld [vmem:[#allocation5 + $0x158] sm:$0xff]
    %v980 = vld [vmem:[#allocation5 + $0x160] sm:$0xff]
    %v981 = vld [vmem:[#allocation5 + $0x168] sm:$0xff]
    %v982 = vld [vmem:[#allocation5 + $0x170] sm:$0xff]
    %v983 = vld [vmem:[#allocation5 + $0x178] sm:$0xff]
    %v984 = vld [vmem:[#allocation5 + $0x180] sm:$0xff]
    %v985 = vld [vmem:[#allocation5 + $0x188] sm:$0xff]
    %v986 = vld [vmem:[#allocation5 + $0x190] sm:$0xff]
    %v987 = vld [vmem:[#allocation5 + $0x198] sm:$0xff]
    %v988 = vld [vmem:[#allocation5 + $0x1a0] sm:$0xff]
    %v989 = vld [vmem:[#allocation5 + $0x1a8] sm:$0xff]
    %v990 = vld [vmem:[#allocation5 + $0x1b0] sm:$0xff]
    %v991 = vld [vmem:[#allocation5 + $0x1b8] sm:$0xff]
    %v992 = vld [vmem:[#allocation5 + $0x1c0] sm:$0xff]
    %v993 = vld [vmem:[#allocation5 + $0x1c8] sm:$0xff]
    %v994 = vld [vmem:[#allocation5 + $0x1d0] sm:$0xff]
    %v995 = vld [vmem:[#allocation5 + $0x1d8] sm:$0xff]
    %v996 = vld [vmem:[#allocation5 + $0x1e0] sm:$0xff]
    %v997 = vld [vmem:[#allocation5 + $0x1e8] sm:$0xff]
    %v998 = vld [vmem:[#allocation5 + $0x1f0] sm:$0xff]
    %v999 = vld [vmem:[#allocation5 + $0x1f8] sm:$0xff]
    %v1000 = vld [vmem:[#allocation5 + $0x200] sm:$0xff]
    %v1001 = vld [vmem:[#allocation5 + $0x208] sm:$0xff]
    %v1002 = vld [vmem:[#allocation5 + $0x210] sm:$0xff]
    %v1003 = vld [vmem:[#allocation5 + $0x218] sm:$0xff]
    %v1004 = vld [vmem:[#allocation5 + $0x220] sm:$0xff]
    %v1005 = vld [vmem:[#allocation5 + $0x228] sm:$0xff]
    %v1006 = vld [vmem:[#allocation5 + $0x230] sm:$0xff]
    %v1007 = vld [vmem:[#allocation5 + $0x238] sm:$0xff]
    %v1008 = vld [vmem:[#allocation5 + $0x240] sm:$0xff]
    %v1009 = vld [vmem:[#allocation5 + $0x248] sm:$0xff]
    %v1010 = vld [vmem:[#allocation5 + $0x250] sm:$0xff]
    %v1011 = vld [vmem:[#allocation5 + $0x258] sm:$0xff]
    %v1012 = vld [vmem:[#allocation5 + $0x260] sm:$0xff]
    %v1013 = vld [vmem:[#allocation5 + $0x268] sm:$0xff]
    %v1014 = vld [vmem:[#allocation5 + $0x270] sm:$0xff]
    %v1015 = vld [vmem:[#allocation5 + $0x278] sm:$0xff]
    %v1016 = vld [vmem:[#allocation5 + $0x280] sm:$0xff]
    %v1017 = vld [vmem:[#allocation5 + $0x288] sm:$0xff]
    %v1018 = vld [vmem:[#allocation5 + $0x290] sm:$0xff]
    %v1019 = vld [vmem:[#allocation5 + $0x298] sm:$0xff]
    %v1020 = vld [vmem:[#allocation5 + $0x2a0] sm:$0xff]
    %v1021 = vld [vmem:[#allocation5 + $0x2a8] sm:$0xff]
    %v1022 = vld [vmem:[#allocation5 + $0x2b0] sm:$0xff]
    %v1023 = vld [vmem:[#allocation5 + $0x2b8] sm:$0xff]
    %v1024 = vld [vmem:[#allocation5 + $0x2c0] sm:$0xff]
    %v1025 = vld [vmem:[#allocation5 + $0x2c8] sm:$0xff]
    %v1026 = vld [vmem:[#allocation5 + $0x2d0] sm:$0xff]
    %v1027 = vld [vmem:[#allocation5 + $0x2d8] sm:$0xff]
    %v1028 = vld [vmem:[#allocation5 + $0x2e0] sm:$0xff]
    %v1029 = vld [vmem:[#allocation5 + $0x2e8] sm:$0xff]
    %v1030 = vld [vmem:[#allocation5 + $0x2f0] sm:$0xff]
    %v1031 = vld [vmem:[#allocation5 + $0x2f8] sm:$0xff]
    %v1032 = vld [vmem:[#allocation5 + $0x300] sm:$0xff]
    %v1033 = vld [vmem:[#allocation5 + $0x308] sm:$0xff]
    %v1034 = vld [vmem:[#allocation5 + $0x310] sm:$0xff]
    %v1035 = vld [vmem:[#allocation5 + $0x318] sm:$0xff]
    %v1036 = vld [vmem:[#allocation5 + $0x320] sm:$0xff]
    %v1037 = vld [vmem:[#allocation5 + $0x328] sm:$0xff]
    %v1038 = vld [vmem:[#allocation5 + $0x330] sm:$0xff]
    %v1039 = vld [vmem:[#allocation5 + $0x338] sm:$0xff]
    %v1040 = vld [vmem:[#allocation5 + $0x340] sm:$0xff]
    %v1041 = vld [vmem:[#allocation5 + $0x348] sm:$0xff]
    %v1042 = vld [vmem:[#allocation5 + $0x350] sm:$0xff]
    %v1043 = vld [vmem:[#allocation5 + $0x358] sm:$0xff]
    %v1044 = vld [vmem:[#allocation5 + $0x360] sm:$0xff]
    %v1045 = vld [vmem:[#allocation5 + $0x368] sm:$0xff]
    %v1046 = vld [vmem:[#allocation5 + $0x370] sm:$0xff]
    %v1047 = vld [vmem:[#allocation5 + $0x378] sm:$0xff]
    %v1048 = vld [vmem:[#allocation5 + $0x380] sm:$0xff]
    %v1049 = vld [vmem:[#allocation5 + $0x388] sm:$0xff]
    %v1050 = vld [vmem:[#allocation5 + $0x390] sm:$0xff]
    %v1051 = vld [vmem:[#allocation5 + $0x398] sm:$0xff]
    %v1052 = vld [vmem:[#allocation5 + $0x3a0] sm:$0xff]
    %v1053 = vld [vmem:[#allocation5 + $0x3a8] sm:$0xff]
    %v1054 = vld [vmem:[#allocation5 + $0x3b0] sm:$0xff]
    %v1055 = vld [vmem:[#allocation5 + $0x3b8] sm:$0xff]
    %v1056 = vld [vmem:[#allocation5 + $0x3c0] sm:$0xff]
    %v1057 = vld [vmem:[#allocation5 + $0x3c8] sm:$0xff]
    %v1058 = vld [vmem:[#allocation5 + $0x3d0] sm:$0xff]
    %v1059 = vld [vmem:[#allocation5 + $0x3d8] sm:$0xff]
    %v1060 = vld [vmem:[#allocation5 + $0x3e0] sm:$0xff]
    %v1061 = vld [vmem:[#allocation5 + $0x3e8] sm:$0xff]
    %v1062 = vld [vmem:[#allocation5 + $0x3f0] sm:$0xff]
    %v1063 = vld [vmem:[#allocation5 + $0x3f8] sm:$0xff]
    %v1064 = vld [vmem:[%s4] sm:$0x3]
    %v1066 = vlaneseq
    %v1067 = vshrl.u32 %v1066, 7
    %v1068 = vsub.s32 0, %v1067
    %v1069 = vrot.slane %v1064, %v1068
    %v1070 = vlaneseq
    %v1071 = vshrl.u32 %v1070, 7
    %v1072 = vsub.s32 1, %v1071
    %v1073 = vrot.slane %v1064, %v1072
    %v1204 = vunpack.c.l.b16 %v936
    %v1205 = vunpack.c.h.b16 %v936
    %v1206 = vunpack.c.l.b16 %v937
    %v1207 = vunpack.c.h.b16 %v937
    %v1208 = vunpack.c.l.b16 %v938
    %v1209 = vunpack.c.h.b16 %v938
    %v1210 = vunpack.c.l.b16 %v939
    %v1211 = vunpack.c.h.b16 %v939
    %v1212 = vunpack.c.l.b16 %v940
    %v1213 = vunpack.c.h.b16 %v940
    %v1214 = vunpack.c.l.b16 %v941
    %v1215 = vunpack.c.h.b16 %v941
    %v1216 = vunpack.c.l.b16 %v942
    %v1217 = vunpack.c.h.b16 %v942
    %v1218 = vunpack.c.l.b16 %v943
    %v1219 = vunpack.c.h.b16 %v943
    %v1220 = vunpack.c.l.b16 %v944
    %v1221 = vunpack.c.h.b16 %v944
    %v1222 = vunpack.c.l.b16 %v945
    %v1223 = vunpack.c.h.b16 %v945
    %v1224 = vunpack.c.l.b16 %v946
    %v1225 = vunpack.c.h.b16 %v946
    %v1226 = vunpack.c.l.b16 %v947
    %v1227 = vunpack.c.h.b16 %v947
    %v1228 = vunpack.c.l.b16 %v948
    %v1229 = vunpack.c.h.b16 %v948
    %v1230 = vunpack.c.l.b16 %v949
    %v1231 = vunpack.c.h.b16 %v949
    %v1232 = vunpack.c.l.b16 %v950
    %v1233 = vunpack.c.h.b16 %v950
    %v1234 = vunpack.c.l.b16 %v951
    %v1235 = vunpack.c.h.b16 %v951
    %v1236 = vunpack.c.l.b16 %v952
    %v1237 = vunpack.c.h.b16 %v952
    %v1238 = vunpack.c.l.b16 %v953
    %v1239 = vunpack.c.h.b16 %v953
    %v1240 = vunpack.c.l.b16 %v954
    %v1241 = vunpack.c.h.b16 %v954
    %v1242 = vunpack.c.l.b16 %v955
    %v1243 = vunpack.c.h.b16 %v955
    %v1244 = vunpack.c.l.b16 %v956
    %v1245 = vunpack.c.h.b16 %v956
    %v1246 = vunpack.c.l.b16 %v957
    %v1247 = vunpack.c.h.b16 %v957
    %v1248 = vunpack.c.l.b16 %v958
    %v1249 = vunpack.c.h.b16 %v958
    %v1250 = vunpack.c.l.b16 %v959
    %v1251 = vunpack.c.h.b16 %v959
    %v1252 = vunpack.c.l.b16 %v960
    %v1253 = vunpack.c.h.b16 %v960
    %v1254 = vunpack.c.l.b16 %v961
    %v1255 = vunpack.c.h.b16 %v961
    %v1256 = vunpack.c.l.b16 %v962
    %v1257 = vunpack.c.h.b16 %v962
    %v1258 = vunpack.c.l.b16 %v963
    %v1259 = vunpack.c.h.b16 %v963
    %v1260 = vunpack.c.l.b16 %v964
    %v1261 = vunpack.c.h.b16 %v964
    %v1262 = vunpack.c.l.b16 %v965
    %v1263 = vunpack.c.h.b16 %v965
    %v1264 = vunpack.c.l.b16 %v966
    %v1265 = vunpack.c.h.b16 %v966
    %v1266 = vunpack.c.l.b16 %v967
    %v1267 = vunpack.c.h.b16 %v967
    %v1268 = vunpack.c.l.b16 %v968
    %v1269 = vunpack.c.h.b16 %v968
    %v1270 = vunpack.c.l.b16 %v969
    %v1271 = vunpack.c.h.b16 %v969
    %v1272 = vunpack.c.l.b16 %v970
    %v1273 = vunpack.c.h.b16 %v970
    %v1274 = vunpack.c.l.b16 %v971
    %v1275 = vunpack.c.h.b16 %v971
    %v1276 = vunpack.c.l.b16 %v972
    %v1277 = vunpack.c.h.b16 %v972
    %v1278 = vunpack.c.l.b16 %v973
    %v1279 = vunpack.c.h.b16 %v973
    %v1280 = vunpack.c.l.b16 %v974
    %v1281 = vunpack.c.h.b16 %v974
    %v1282 = vunpack.c.l.b16 %v975
    %v1283 = vunpack.c.h.b16 %v975
    %v1284 = vunpack.c.l.b16 %v976
    %v1285 = vunpack.c.h.b16 %v976
    %v1286 = vunpack.c.l.b16 %v977
    %v1287 = vunpack.c.h.b16 %v977
    %v1288 = vunpack.c.l.b16 %v978
    %v1289 = vunpack.c.h.b16 %v978
    %v1290 = vunpack.c.l.b16 %v979
    %v1291 = vunpack.c.h.b16 %v979
    %v1292 = vunpack.c.l.b16 %v980
    %v1293 = vunpack.c.h.b16 %v980
    %v1294 = vunpack.c.l.b16 %v981
    %v1295 = vunpack.c.h.b16 %v981
    %v1296 = vunpack.c.l.b16 %v982
    %v1297 = vunpack.c.h.b16 %v982
    %v1298 = vunpack.c.l.b16 %v983
    %v1299 = vunpack.c.h.b16 %v983
    %v1300 = vunpack.c.l.b16 %v984
    %v1301 = vunpack.c.h.b16 %v984
    %v1302 = vunpack.c.l.b16 %v985
    %v1303 = vunpack.c.h.b16 %v985
    %v1304 = vunpack.c.l.b16 %v986
    %v1305 = vunpack.c.h.b16 %v986
    %v1306 = vunpack.c.l.b16 %v987
    %v1307 = vunpack.c.h.b16 %v987
    %v1308 = vunpack.c.l.b16 %v988
    %v1309 = vunpack.c.h.b16 %v988
    %v1310 = vunpack.c.l.b16 %v989
    %v1311 = vunpack.c.h.b16 %v989
    %v1312 = vunpack.c.l.b16 %v990
    %v1313 = vunpack.c.h.b16 %v990
    %v1314 = vunpack.c.l.b16 %v991
    %v1315 = vunpack.c.h.b16 %v991
    %v1316 = vunpack.c.l.b16 %v992
    %v1317 = vunpack.c.h.b16 %v992
    %v1318 = vunpack.c.l.b16 %v993
    %v1319 = vunpack.c.h.b16 %v993
    %v1320 = vunpack.c.l.b16 %v994
    %v1321 = vunpack.c.h.b16 %v994
    %v1322 = vunpack.c.l.b16 %v995
    %v1323 = vunpack.c.h.b16 %v995
    %v1324 = vunpack.c.l.b16 %v996
    %v1325 = vunpack.c.h.b16 %v996
    %v1326 = vunpack.c.l.b16 %v997
    %v1327 = vunpack.c.h.b16 %v997
    %v1328 = vunpack.c.l.b16 %v998
    %v1329 = vunpack.c.h.b16 %v998
    %v1330 = vunpack.c.l.b16 %v999
    %v1331 = vunpack.c.h.b16 %v999
    %v1332 = vunpack.c.l.b16 %v1000
    %v1333 = vunpack.c.h.b16 %v1000
    %v1334 = vunpack.c.l.b16 %v1001
    %v1335 = vunpack.c.h.b16 %v1001
    %v1336 = vunpack.c.l.b16 %v1002
    %v1337 = vunpack.c.h.b16 %v1002
    %v1338 = vunpack.c.l.b16 %v1003
    %v1339 = vunpack.c.h.b16 %v1003
    %v1340 = vunpack.c.l.b16 %v1004
    %v1341 = vunpack.c.h.b16 %v1004
    %v1342 = vunpack.c.l.b16 %v1005
    %v1343 = vunpack.c.h.b16 %v1005
    %v1344 = vunpack.c.l.b16 %v1006
    %v1345 = vunpack.c.h.b16 %v1006
    %v1346 = vunpack.c.l.b16 %v1007
    %v1347 = vunpack.c.h.b16 %v1007
    %v1348 = vunpack.c.l.b16 %v1008
    %v1349 = vunpack.c.h.b16 %v1008
    %v1350 = vunpack.c.l.b16 %v1009
    %v1351 = vunpack.c.h.b16 %v1009
    %v1352 = vunpack.c.l.b16 %v1010
    %v1353 = vunpack.c.h.b16 %v1010
    %v1354 = vunpack.c.l.b16 %v1011
    %v1355 = vunpack.c.h.b16 %v1011
    %v1356 = vunpack.c.l.b16 %v1012
    %v1357 = vunpack.c.h.b16 %v1012
    %v1358 = vunpack.c.l.b16 %v1013
    %v1359 = vunpack.c.h.b16 %v1013
    %v1360 = vunpack.c.l.b16 %v1014
    %v1361 = vunpack.c.h.b16 %v1014
    %v1362 = vunpack.c.l.b16 %v1015
    %v1363 = vunpack.c.h.b16 %v1015
    %v1364 = vunpack.c.l.b16 %v1016
    %v1365 = vunpack.c.h.b16 %v1016
    %v1366 = vunpack.c.l.b16 %v1017
    %v1367 = vunpack.c.h.b16 %v1017
    %v1368 = vunpack.c.l.b16 %v1018
    %v1369 = vunpack.c.h.b16 %v1018
    %v1370 = vunpack.c.l.b16 %v1019
    %v1371 = vunpack.c.h.b16 %v1019
    %v1372 = vunpack.c.l.b16 %v1020
    %v1373 = vunpack.c.h.b16 %v1020
    %v1374 = vunpack.c.l.b16 %v1021
    %v1375 = vunpack.c.h.b16 %v1021
    %v1376 = vunpack.c.l.b16 %v1022
    %v1377 = vunpack.c.h.b16 %v1022
    %v1378 = vunpack.c.l.b16 %v1023
    %v1379 = vunpack.c.h.b16 %v1023
    %v1380 = vunpack.c.l.b16 %v1024
    %v1381 = vunpack.c.h.b16 %v1024
    %v1382 = vunpack.c.l.b16 %v1025
    %v1383 = vunpack.c.h.b16 %v1025
    %v1384 = vunpack.c.l.b16 %v1026
    %v1385 = vunpack.c.h.b16 %v1026
    %v1386 = vunpack.c.l.b16 %v1027
    %v1387 = vunpack.c.h.b16 %v1027
    %v1388 = vunpack.c.l.b16 %v1028
    %v1389 = vunpack.c.h.b16 %v1028
    %v1390 = vunpack.c.l.b16 %v1029
    %v1391 = vunpack.c.h.b16 %v1029
    %v1392 = vunpack.c.l.b16 %v1030
    %v1393 = vunpack.c.h.b16 %v1030
    %v1394 = vunpack.c.l.b16 %v1031
    %v1395 = vunpack.c.h.b16 %v1031
    %v1396 = vunpack.c.l.b16 %v1032
    %v1397 = vunpack.c.h.b16 %v1032
    %v1398 = vunpack.c.l.b16 %v1033
    %v1399 = vunpack.c.h.b16 %v1033
    %v1400 = vunpack.c.l.b16 %v1034
    %v1401 = vunpack.c.h.b16 %v1034
    %v1402 = vunpack.c.l.b16 %v1035
    %v1403 = vunpack.c.h.b16 %v1035
    %v1404 = vunpack.c.l.b16 %v1036
    %v1405 = vunpack.c.h.b16 %v1036
    %v1406 = vunpack.c.l.b16 %v1037
    %v1407 = vunpack.c.h.b16 %v1037
    %v1408 = vunpack.c.l.b16 %v1038
    %v1409 = vunpack.c.h.b16 %v1038
    %v1410 = vunpack.c.l.b16 %v1039
    %v1411 = vunpack.c.h.b16 %v1039
    %v1412 = vunpack.c.l.b16 %v1040
    %v1413 = vunpack.c.h.b16 %v1040
    %v1414 = vunpack.c.l.b16 %v1041
    %v1415 = vunpack.c.h.b16 %v1041
    %v1416 = vunpack.c.l.b16 %v1042
    %v1417 = vunpack.c.h.b16 %v1042
    %v1418 = vunpack.c.l.b16 %v1043
    %v1419 = vunpack.c.h.b16 %v1043
    %v1420 = vunpack.c.l.b16 %v1044
    %v1421 = vunpack.c.h.b16 %v1044
    %v1422 = vunpack.c.l.b16 %v1045
    %v1423 = vunpack.c.h.b16 %v1045
    %v1424 = vunpack.c.l.b16 %v1046
    %v1425 = vunpack.c.h.b16 %v1046
    %v1426 = vunpack.c.l.b16 %v1047
    %v1427 = vunpack.c.h.b16 %v1047
    %v1428 = vunpack.c.l.b16 %v1048
    %v1429 = vunpack.c.h.b16 %v1048
    %v1430 = vunpack.c.l.b16 %v1049
    %v1431 = vunpack.c.h.b16 %v1049
    %v1432 = vunpack.c.l.b16 %v1050
    %v1433 = vunpack.c.h.b16 %v1050
    %v1434 = vunpack.c.l.b16 %v1051
    %v1435 = vunpack.c.h.b16 %v1051
    %v1436 = vunpack.c.l.b16 %v1052
    %v1437 = vunpack.c.h.b16 %v1052
    %v1438 = vunpack.c.l.b16 %v1053
    %v1439 = vunpack.c.h.b16 %v1053
    %v1440 = vunpack.c.l.b16 %v1054
    %v1441 = vunpack.c.h.b16 %v1054
    %v1442 = vunpack.c.l.b16 %v1055
    %v1443 = vunpack.c.h.b16 %v1055
    %v1444 = vunpack.c.l.b16 %v1056
    %v1445 = vunpack.c.h.b16 %v1056
    %v1446 = vunpack.c.l.b16 %v1057
    %v1447 = vunpack.c.h.b16 %v1057
    %v1448 = vunpack.c.l.b16 %v1058
    %v1449 = vunpack.c.h.b16 %v1058
    %v1450 = vunpack.c.l.b16 %v1059
    %v1451 = vunpack.c.h.b16 %v1059
    %v1452 = vunpack.c.l.b16 %v1060
    %v1453 = vunpack.c.h.b16 %v1060
    %v1454 = vunpack.c.l.b16 %v1061
    %v1455 = vunpack.c.h.b16 %v1061
    %v1456 = vunpack.c.l.b16 %v1062
    %v1457 = vunpack.c.h.b16 %v1062
    %v1458 = vunpack.c.l.b16 %v1063
    %v1459 = vunpack.c.h.b16 %v1063
    %v1460 = vpack.c.b16 %v1206, %v1204
    %v1461 = vpack.c.b16 %v1207, %v1205
    %v1462 = vpack.c.b16 %v1210, %v1208
    %v1463 = vpack.c.b16 %v1211, %v1209
    %v1464 = vpack.c.b16 %v1214, %v1212
    %v1465 = vpack.c.b16 %v1215, %v1213
    %v1466 = vpack.c.b16 %v1218, %v1216
    %v1467 = vpack.c.b16 %v1219, %v1217
    %v1468 = vpack.c.b16 %v1222, %v1220
    %v1469 = vpack.c.b16 %v1223, %v1221
    %v1470 = vpack.c.b16 %v1226, %v1224
    %v1471 = vpack.c.b16 %v1227, %v1225
    %v1472 = vpack.c.b16 %v1230, %v1228
    %v1473 = vpack.c.b16 %v1231, %v1229
    %v1474 = vpack.c.b16 %v1234, %v1232
    %v1475 = vpack.c.b16 %v1235, %v1233
    %v1476 = vpack.c.b16 %v1238, %v1236
    %v1477 = vpack.c.b16 %v1239, %v1237
    %v1478 = vpack.c.b16 %v1242, %v1240
    %v1479 = vpack.c.b16 %v1243, %v1241
    %v1480 = vpack.c.b16 %v1246, %v1244
    %v1481 = vpack.c.b16 %v1247, %v1245
    %v1482 = vpack.c.b16 %v1250, %v1248
    %v1483 = vpack.c.b16 %v1251, %v1249
    %v1484 = vpack.c.b16 %v1254, %v1252
    %v1485 = vpack.c.b16 %v1255, %v1253
    %v1486 = vpack.c.b16 %v1258, %v1256
    %v1487 = vpack.c.b16 %v1259, %v1257
    %v1488 = vpack.c.b16 %v1262, %v1260
    %v1489 = vpack.c.b16 %v1263, %v1261
    %v1490 = vpack.c.b16 %v1266, %v1264
    %v1491 = vpack.c.b16 %v1267, %v1265
    %v1492 = vpack.c.b16 %v1270, %v1268
    %v1493 = vpack.c.b16 %v1271, %v1269
    %v1494 = vpack.c.b16 %v1274, %v1272
    %v1495 = vpack.c.b16 %v1275, %v1273
    %v1496 = vpack.c.b16 %v1278, %v1276
    %v1497 = vpack.c.b16 %v1279, %v1277
    %v1498 = vpack.c.b16 %v1282, %v1280
    %v1499 = vpack.c.b16 %v1283, %v1281
    %v1500 = vpack.c.b16 %v1286, %v1284
    %v1501 = vpack.c.b16 %v1287, %v1285
    %v1502 = vpack.c.b16 %v1290, %v1288
    %v1503 = vpack.c.b16 %v1291, %v1289
    %v1504 = vpack.c.b16 %v1294, %v1292
    %v1505 = vpack.c.b16 %v1295, %v1293
    %v1506 = vpack.c.b16 %v1298, %v1296
    %v1507 = vpack.c.b16 %v1299, %v1297
    %v1508 = vpack.c.b16 %v1302, %v1300
    %v1509 = vpack.c.b16 %v1303, %v1301
    %v1510 = vpack.c.b16 %v1306, %v1304
    %v1511 = vpack.c.b16 %v1307, %v1305
    %v1512 = vpack.c.b16 %v1310, %v1308
    %v1513 = vpack.c.b16 %v1311, %v1309
    %v1514 = vpack.c.b16 %v1314, %v1312
    %v1515 = vpack.c.b16 %v1315, %v1313
    %v1516 = vpack.c.b16 %v1318, %v1316
    %v1517 = vpack.c.b16 %v1319, %v1317
    %v1518 = vpack.c.b16 %v1322, %v1320
    %v1519 = vpack.c.b16 %v1323, %v1321
    %v1520 = vpack.c.b16 %v1326, %v1324
    %v1521 = vpack.c.b16 %v1327, %v1325
    %v1522 = vpack.c.b16 %v1330, %v1328
    %v1523 = vpack.c.b16 %v1331, %v1329
    %v1524 = vpack.c.b16 %v1334, %v1332
    %v1525 = vpack.c.b16 %v1335, %v1333
    %v1526 = vpack.c.b16 %v1338, %v1336
    %v1527 = vpack.c.b16 %v1339, %v1337
    %v1528 = vpack.c.b16 %v1342, %v1340
    %v1529 = vpack.c.b16 %v1343, %v1341
    %v1530 = vpack.c.b16 %v1346, %v1344
    %v1531 = vpack.c.b16 %v1347, %v1345
    %v1532 = vpack.c.b16 %v1350, %v1348
    %v1533 = vpack.c.b16 %v1351, %v1349
    %v1534 = vpack.c.b16 %v1354, %v1352
    %v1535 = vpack.c.b16 %v1355, %v1353
    %v1536 = vpack.c.b16 %v1358, %v1356
    %v1537 = vpack.c.b16 %v1359, %v1357
    %v1538 = vpack.c.b16 %v1362, %v1360
    %v1539 = vpack.c.b16 %v1363, %v1361
    %v1540 = vpack.c.b16 %v1366, %v1364
    %v1541 = vpack.c.b16 %v1367, %v1365
    %v1542 = vpack.c.b16 %v1370, %v1368
    %v1543 = vpack.c.b16 %v1371, %v1369
    %v1544 = vpack.c.b16 %v1374, %v1372
    %v1545 = vpack.c.b16 %v1375, %v1373
    %v1546 = vpack.c.b16 %v1378, %v1376
    %v1547 = vpack.c.b16 %v1379, %v1377
    %v1548 = vpack.c.b16 %v1382, %v1380
    %v1549 = vpack.c.b16 %v1383, %v1381
    %v1550 = vpack.c.b16 %v1386, %v1384
    %v1551 = vpack.c.b16 %v1387, %v1385
    %v1552 = vpack.c.b16 %v1390, %v1388
    %v1553 = vpack.c.b16 %v1391, %v1389
    %v1554 = vpack.c.b16 %v1394, %v1392
    %v1555 = vpack.c.b16 %v1395, %v1393
    %v1556 = vpack.c.b16 %v1398, %v1396
    %v1557 = vpack.c.b16 %v1399, %v1397
    %v1558 = vpack.c.b16 %v1402, %v1400
    %v1559 = vpack.c.b16 %v1403, %v1401
    %v1560 = vpack.c.b16 %v1406, %v1404
    %v1561 = vpack.c.b16 %v1407, %v1405
    %v1562 = vpack.c.b16 %v1410, %v1408
    %v1563 = vpack.c.b16 %v1411, %v1409
    %v1564 = vpack.c.b16 %v1414, %v1412
    %v1565 = vpack.c.b16 %v1415, %v1413
    %v1566 = vpack.c.b16 %v1418, %v1416
    %v1567 = vpack.c.b16 %v1419, %v1417
    %v1568 = vpack.c.b16 %v1422, %v1420
    %v1569 = vpack.c.b16 %v1423, %v1421
    %v1570 = vpack.c.b16 %v1426, %v1424
    %v1571 = vpack.c.b16 %v1427, %v1425
    %v1572 = vpack.c.b16 %v1430, %v1428
    %v1573 = vpack.c.b16 %v1431, %v1429
    %v1574 = vpack.c.b16 %v1434, %v1432
    %v1575 = vpack.c.b16 %v1435, %v1433
    %v1576 = vpack.c.b16 %v1438, %v1436
    %v1577 = vpack.c.b16 %v1439, %v1437
    %v1578 = vpack.c.b16 %v1442, %v1440
    %v1579 = vpack.c.b16 %v1443, %v1441
    %v1580 = vpack.c.b16 %v1446, %v1444
    %v1581 = vpack.c.b16 %v1447, %v1445
    %v1582 = vpack.c.b16 %v1450, %v1448
    %v1583 = vpack.c.b16 %v1451, %v1449
    %v1584 = vpack.c.b16 %v1454, %v1452
    %v1585 = vpack.c.b16 %v1455, %v1453
    %v1586 = vpack.c.b16 %v1458, %v1456
    %v1587 = vpack.c.b16 %v1459, %v1457
    %1716 = vmatprep.subr.bf16.mxu0 %v1475
    %1717 = vmatpush1.bf16.msra.mxu0 %v1474
    %1718 = vmatprep.subr.bf16.mxu0 %v1473
    %1719 = vmatpush1.bf16.msra.mxu0 %v1472
    %1720 = vmatprep.subr.bf16.mxu0 %v1471
    %1721 = vmatpush1.bf16.msra.mxu0 %v1470
    %1722 = vmatprep.subr.bf16.mxu0 %v1469
    %1723 = vmatpush1.bf16.msra.mxu0 %v1468
    %1724 = vmatprep.subr.bf16.mxu0 %v1467
    %1725 = vmatpush1.bf16.msra.mxu0 %v1466
    %1726 = vmatprep.subr.bf16.mxu0 %v1465
    %1727 = vmatpush1.bf16.msra.mxu0 %v1464
    %1728 = vmatprep.subr.bf16.mxu0 %v1463
    %1729 = vmatpush1.bf16.msra.mxu0 %v1462
    %1730 = vmatprep.subr.bf16.mxu0 %v1461
    %1731 = vmatpush1.bf16.msra.mxu0 %v1460
    %1732 = vmatprep.subr.bf16.mxu0 %v1491
    %1733 = vmatpush2.bf16.msra.mxu0 %v1490
    %1734 = vmatprep.subr.bf16.mxu0 %v1489
    %1735 = vmatpush2.bf16.msra.mxu0 %v1488
    %1736 = vmatprep.subr.bf16.mxu0 %v1487
    %1737 = vmatpush2.bf16.msra.mxu0 %v1486
    %1738 = vmatprep.subr.bf16.mxu0 %v1485
    %1739 = vmatpush2.bf16.msra.mxu0 %v1484
    %1740 = vmatprep.subr.bf16.mxu0 %v1483
    %1741 = vmatpush2.bf16.msra.mxu0 %v1482
    %1742 = vmatprep.subr.bf16.mxu0 %v1481
    %1743 = vmatpush2.bf16.msra.mxu0 %v1480
    %1744 = vmatprep.subr.bf16.mxu0 %v1479
    %1745 = vmatpush2.bf16.msra.mxu0 %v1478
    %1746 = vmatprep.subr.bf16.mxu0 %v1477
    %1747 = vmatpush2.bf16.msra.mxu0 %v1476
    %1748 = vmatprep.mubr.bf16.mxu0 %v921
    %1749 = vmatmul.mubr.bf16.gmra.mxu0 %v920
    %v1750 = vpop.f32.mrf.mxu0
    %v1751 = vadd.f32 %v1069, %v1750
    %v1752 = vpop.f32.mrf.mxu0
    %v1753 = vadd.f32 %v1073, %v1752
    %v1754 = vpop.f32.mrf.mxu0
    %v1755 = vadd.f32 %v1069, %v1754
    %v1756 = vpop.f32.mrf.mxu0
    %v1757 = vadd.f32 %v1073, %v1756
    %1758 = vmatprep.mubr.bf16.mxu0 %v929
    %1759 = vmatmul.mubr.bf16.gmra.mxu0 %v928
    %v1760 = vpop.f32.mrf.mxu0
    %v1761 = vadd.f32 %v1069, %v1760
    %v1762 = vpop.f32.mrf.mxu0
    %v1763 = vadd.f32 %v1073, %v1762
    %v1764 = vpop.f32.mrf.mxu0
    %v1765 = vpop.f32.mrf.mxu0
    %1766 = vdwg.mxu0
    %1767 = vmatprep.subr.bf16.mxu0 %v1507
    %1768 = vmatpush1.bf16.msra.mxu0 %v1506
    %1769 = vmatprep.subr.bf16.mxu0 %v1505
    %1770 = vmatpush1.bf16.msra.mxu0 %v1504
    %1771 = vmatprep.subr.bf16.mxu0 %v1503
    %1772 = vmatpush1.bf16.msra.mxu0 %v1502
    %1773 = vmatprep.subr.bf16.mxu0 %v1501
    %1774 = vmatpush1.bf16.msra.mxu0 %v1500
    %1775 = vmatprep.subr.bf16.mxu0 %v1499
    %1776 = vmatpush1.bf16.msra.mxu0 %v1498
    %1777 = vmatprep.subr.bf16.mxu0 %v1497
    %1778 = vmatpush1.bf16.msra.mxu0 %v1496
    %1779 = vmatprep.subr.bf16.mxu0 %v1495
    %1780 = vmatpush1.bf16.msra.mxu0 %v1494
    %1781 = vmatprep.subr.bf16.mxu0 %v1493
    %1782 = vmatpush1.bf16.msra.mxu0 %v1492
    %1783 = vmatprep.subr.bf16.mxu0 %v1523
    %1784 = vmatpush2.bf16.msra.mxu0 %v1522
    %1785 = vmatprep.subr.bf16.mxu0 %v1521
    %1786 = vmatpush2.bf16.msra.mxu0 %v1520
    %1787 = vmatprep.subr.bf16.mxu0 %v1519
    %1788 = vmatpush2.bf16.msra.mxu0 %v1518
    %1789 = vmatprep.subr.bf16.mxu0 %v1517
    %1790 = vmatpush2.bf16.msra.mxu0 %v1516
    %1791 = vmatprep.subr.bf16.mxu0 %v1515
    %1792 = vmatpush2.bf16.msra.mxu0 %v1514
    %1793 = vmatprep.subr.bf16.mxu0 %v1513
    %1794 = vmatpush2.bf16.msra.mxu0 %v1512
    %1795 = vmatprep.subr.bf16.mxu0 %v1511
    %1796 = vmatpush2.bf16.msra.mxu0 %v1510
    %1797 = vmatprep.subr.bf16.mxu0 %v1509
    %1798 = vmatpush2.bf16.msra.mxu0 %v1508
    %1799 = vmatprep.mubr.bf16.mxu0 %v923
    %1800 = vmatmul.mubr.bf16.gmra.mxu0 %v922
    %v1801 = vpop.f32.mrf.mxu0
    %v1802 = vadd.f32 %v1751, %v1801
    %v1803 = vpop.f32.mrf.mxu0
    %v1804 = vadd.f32 %v1753, %v1803
    %v1805 = vpop.f32.mrf.mxu0
    %v1806 = vadd.f32 %v1755, %v1805
    %v1807 = vpop.f32.mrf.mxu0
    %v1808 = vadd.f32 %v1757, %v1807
    %1809 = vmatprep.mubr.bf16.mxu0 %v931
    %1810 = vmatmul.mubr.bf16.gmra.mxu0 %v930
    %v1811 = vpop.f32.mrf.mxu0
    %v1812 = vadd.f32 %v1761, %v1811
    %v1813 = vpop.f32.mrf.mxu0
    %v1814 = vadd.f32 %v1763, %v1813
    %v1815 = vpop.f32.mrf.mxu0
    %v1816 = vpop.f32.mrf.mxu0
    %1817 = vdwg.mxu0
    %1818 = vmatprep.subr.bf16.mxu0 %v1539
    %1819 = vmatpush1.bf16.msra.mxu0 %v1538
    %1820 = vmatprep.subr.bf16.mxu0 %v1537
    %1821 = vmatpush1.bf16.msra.mxu0 %v1536
    %1822 = vmatprep.subr.bf16.mxu0 %v1535
    %1823 = vmatpush1.bf16.msra.mxu0 %v1534
    %1824 = vmatprep.subr.bf16.mxu0 %v1533
    %1825 = vmatpush1.bf16.msra.mxu0 %v1532
    %1826 = vmatprep.subr.bf16.mxu0 %v1531
    %1827 = vmatpush1.bf16.msra.mxu0 %v1530
    %1828 = vmatprep.subr.bf16.mxu0 %v1529
    %1829 = vmatpush1.bf16.msra.mxu0 %v1528
    %1830 = vmatprep.subr.bf16.mxu0 %v1527
    %1831 = vmatpush1.bf16.msra.mxu0 %v1526
    %1832 = vmatprep.subr.bf16.mxu0 %v1525
    %1833 = vmatpush1.bf16.msra.mxu0 %v1524
    %1834 = vmatprep.subr.bf16.mxu0 %v1555
    %1835 = vmatpush2.bf16.msra.mxu0 %v1554
    %1836 = vmatprep.subr.bf16.mxu0 %v1553
    %1837 = vmatpush2.bf16.msra.mxu0 %v1552
    %1838 = vmatprep.subr.bf16.mxu0 %v1551
    %1839 = vmatpush2.bf16.msra.mxu0 %v1550
    %1840 = vmatprep.subr.bf16.mxu0 %v1549
    %1841 = vmatpush2.bf16.msra.mxu0 %v1548
    %1842 = vmatprep.subr.bf16.mxu0 %v1547
    %1843 = vmatpush2.bf16.msra.mxu0 %v1546
    %1844 = vmatprep.subr.bf16.mxu0 %v1545
    %1845 = vmatpush2.bf16.msra.mxu0 %v1544
    %1846 = vmatprep.subr.bf16.mxu0 %v1543
    %1847 = vmatpush2.bf16.msra.mxu0 %v1542
    %1848 = vmatprep.subr.bf16.mxu0 %v1541
    %1849 = vmatpush2.bf16.msra.mxu0 %v1540
    %1850 = vmatprep.mubr.bf16.mxu0 %v925
    %1851 = vmatmul.mubr.bf16.gmra.mxu0 %v924
    %v1852 = vpop.f32.mrf.mxu0
    %v1853 = vadd.f32 %v1802, %v1852
    %v1854 = vpop.f32.mrf.mxu0
    %v1855 = vadd.f32 %v1804, %v1854
    %v1856 = vpop.f32.mrf.mxu0
    %v1857 = vadd.f32 %v1806, %v1856
    %v1858 = vpop.f32.mrf.mxu0
    %v1859 = vadd.f32 %v1808, %v1858
    %1860 = vmatprep.mubr.bf16.mxu0 %v933
    %1861 = vmatmul.mubr.bf16.gmra.mxu0 %v932
    %v1862 = vpop.f32.mrf.mxu0
    %v1863 = vadd.f32 %v1812, %v1862
    %v1864 = vpop.f32.mrf.mxu0
    %v1865 = vadd.f32 %v1814, %v1864
    %v1866 = vpop.f32.mrf.mxu0
    %v1867 = vpop.f32.mrf.mxu0
    %1868 = vdwg.mxu0
    %1869 = vmatprep.subr.bf16.mxu0 %v1571
    %1870 = vmatpush1.bf16.msra.mxu0 %v1570
    %1871 = vmatprep.subr.bf16.mxu0 %v1569
    %1872 = vmatpush1.bf16.msra.mxu0 %v1568
    %1873 = vmatprep.subr.bf16.mxu0 %v1567
    %1874 = vmatpush1.bf16.msra.mxu0 %v1566
    %1875 = vmatprep.subr.bf16.mxu0 %v1565
    %1876 = vmatpush1.bf16.msra.mxu0 %v1564
    %1877 = vmatprep.subr.bf16.mxu0 %v1563
    %1878 = vmatpush1.bf16.msra.mxu0 %v1562
    %1879 = vmatprep.subr.bf16.mxu0 %v1561
    %1880 = vmatpush1.bf16.msra.mxu0 %v1560
    %1881 = vmatprep.subr.bf16.mxu0 %v1559
    %1882 = vmatpush1.bf16.msra.mxu0 %v1558
    %1883 = vmatprep.subr.bf16.mxu0 %v1557
    %1884 = vmatpush1.bf16.msra.mxu0 %v1556
    %1885 = vmatprep.subr.bf16.mxu0 %v1587
    %1886 = vmatpush2.bf16.msra.mxu0 %v1586
    %1887 = vmatprep.subr.bf16.mxu0 %v1585
    %1888 = vmatpush2.bf16.msra.mxu0 %v1584
    %1889 = vmatprep.subr.bf16.mxu0 %v1583
    %1890 = vmatpush2.bf16.msra.mxu0 %v1582
    %1891 = vmatprep.subr.bf16.mxu0 %v1581
    %1892 = vmatpush2.bf16.msra.mxu0 %v1580
    %1893 = vmatprep.subr.bf16.mxu0 %v1579
    %1894 = vmatpush2.bf16.msra.mxu0 %v1578
    %1895 = vmatprep.subr.bf16.mxu0 %v1577
    %1896 = vmatpush2.bf16.msra.mxu0 %v1576
    %1897 = vmatprep.subr.bf16.mxu0 %v1575
    %1898 = vmatpush2.bf16.msra.mxu0 %v1574
    %1899 = vmatprep.subr.bf16.mxu0 %v1573
    %1900 = vmatpush2.bf16.msra.mxu0 %v1572
    %1901 = vmatprep.mubr.bf16.mxu0 %v927
    %1902 = vmatmul.mubr.bf16.gmra.mxu0 %v926
    %v1903 = vpop.f32.mrf.mxu0
    %v1904 = vadd.f32 %v1853, %v1903
    %v1905 = vpop.f32.mrf.mxu0
    %v1906 = vadd.f32 %v1855, %v1905
    %v1907 = vpop.f32.mrf.mxu0
    %v1908 = vadd.f32 %v1857, %v1907
    %v1909 = vpop.f32.mrf.mxu0
    %v1910 = vadd.f32 %v1859, %v1909
    %1911 = vmatprep.mubr.bf16.mxu0 %v935
    %1912 = vmatmul.mubr.bf16.gmra.mxu0 %v934
    %v1913 = vpop.f32.mrf.mxu0
    %v1914 = vadd.f32 %v1863, %v1913
    %v1915 = vpop.f32.mrf.mxu0
    %v1916 = vadd.f32 %v1865, %v1915
    %v1917 = vpop.f32.mrf.mxu0
    %v1918 = vpop.f32.mrf.mxu0
    %1919 = vdwg.mxu0
    %v1920 = vmul.f32 %v1904, 0.5
    %v1921 = vmul.f32 %v1906, 0.5
    %v1922 = vmul.f32 %v1908, 0.5
    %v1923 = vmul.f32 %v1910, 0.5
    %v1924 = vmul.f32 %v1914, 0.5
    %v1925 = vmul.f32 %v1916, 0.5
    %v1926 = vmul.f32 %v1904, 0.044715
    %v1927 = vmul.f32 %v1906, 0.044715
    %v1928 = vmul.f32 %v1908, 0.044715
    %v1929 = vmul.f32 %v1910, 0.044715
    %v1930 = vmul.f32 %v1914, 0.044715
    %v1931 = vmul.f32 %v1916, 0.044715
    %v1932 = vmul.f32 %v1926, %v1904
    %v1933 = vmul.f32 %v1927, %v1906
    %v1934 = vmul.f32 %v1928, %v1908
    %v1935 = vmul.f32 %v1929, %v1910
    %v1936 = vmul.f32 %v1930, %v1914
    %v1937 = vmul.f32 %v1931, %v1916
    %v1938 = vmul.f32 %v1932, %v1904
    %v1939 = vmul.f32 %v1933, %v1906
    %v1940 = vmul.f32 %v1934, %v1908
    %v1941 = vmul.f32 %v1935, %v1910
    %v1942 = vmul.f32 %v1936, %v1914
    %v1943 = vmul.f32 %v1937, %v1916
    %v1944 = vadd.f32 %v1904, %v1938
    %v1945 = vadd.f32 %v1906, %v1939
    %v1946 = vadd.f32 %v1908, %v1940
    %v1947 = vadd.f32 %v1910, %v1941
    %v1948 = vadd.f32 %v1914, %v1942
    %v1949 = vadd.f32 %v1916, %v1943
    %v1950 = vmul.f32 %v1944, 0.7978846
    %v1951 = vmul.f32 %v1945, 0.7978846
    %v1952 = vmul.f32 %v1946, 0.7978846
    %v1953 = vmul.f32 %v1947, 0.7978846
    %v1954 = vmul.f32 %v1948, 0.7978846
    %v1955 = vmul.f32 %v1949, 0.7978846
    %v1956 = vtanh.pop %v1950
    %v1957 = vtanh.pop %v1951
    %v1958 = vtanh.pop %v1952
    %v1959 = vtanh.pop %v1953
    %v1960 = vtanh.pop %v1954
    %v1961 = vtanh.pop %v1955
    %v1962 = vadd.f32 %v1956, 1.0
    %v1963 = vadd.f32 %v1957, 1.0
    %v1964 = vadd.f32 %v1958, 1.0
    %v1965 = vadd.f32 %v1959, 1.0
    %v1966 = vadd.f32 %v1960, 1.0
    %v1967 = vadd.f32 %v1961, 1.0
    %v1968 = vmul.f32 %v1920, %v1962
    %v1969 = vmul.f32 %v1921, %v1963
    %v1970 = vmul.f32 %v1922, %v1964
    %v1971 = vmul.f32 %v1923, %v1965
    %v1972 = vmul.f32 %v1924, %v1966
    %v1973 = vmul.f32 %v1925, %v1967
    %v1974 = vpack.c.bf16 %v1970, %v1968
    %v1975 = vpack.c.bf16 %v1971, %v1969
    %v1976 = vpack.c.bf16 %v1972, %v1972
    %v1977 = vpack.c.bf16 %v1973, %v1973
    %v1978 = vld [vmem:[#allocation7] sm:$0xf]
    %v1979 = vld [vmem:[#allocation7 + $0x4] sm:$0xf]
    %v1980 = vld [vmem:[#allocation7 + $0x8] sm:$0xf]
    %v1981 = vld [vmem:[#allocation7 + $0xc] sm:$0xf]
    %v1982 = vld [vmem:[#allocation7 + $0x10] sm:$0xf]
    %v1983 = vld [vmem:[#allocation7 + $0x14] sm:$0xf]
    %v1984 = vld [vmem:[#allocation7 + $0x18] sm:$0xf]
    %v1985 = vld [vmem:[#allocation7 + $0x1c] sm:$0xf]
    %v1986 = vld [vmem:[#allocation7 + $0x20] sm:$0xf]
    %v1987 = vld [vmem:[#allocation7 + $0x24] sm:$0xf]
    %v1988 = vld [vmem:[#allocation7 + $0x28] sm:$0xf]
    %v1989 = vld [vmem:[#allocation7 + $0x2c] sm:$0xf]
    %v1990 = vld [vmem:[#allocation7 + $0x30] sm:$0xf]
    %v1991 = vld [vmem:[#allocation7 + $0x34] sm:$0xf]
    %v1992 = vld [vmem:[#allocation7 + $0x38] sm:$0xf]
    %v1993 = vld [vmem:[#allocation7 + $0x3c] sm:$0xf]
    %v1994 = vld [vmem:[#allocation7 + $0x40] sm:$0xf]
    %v1995 = vld [vmem:[#allocation7 + $0x44] sm:$0xf]
    %v1996 = vld [vmem:[#allocation7 + $0x48] sm:$0xf]
    %v1997 = vld [vmem:[#allocation7 + $0x4c] sm:$0xf]
    %v1998 = vld [vmem:[#allocation7 + $0x50] sm:$0xf]
    %v1999 = vld [vmem:[#allocation7 + $0x54] sm:$0xf]
    %v2000 = vld [vmem:[#allocation7 + $0x58] sm:$0xf]
    %v2001 = vld [vmem:[#allocation7 + $0x5c] sm:$0xf]
    %v2002 = vld [vmem:[#allocation7 + $0x60] sm:$0xf]
    %v2003 = vld [vmem:[#allocation7 + $0x64] sm:$0xf]
    %v2004 = vld [vmem:[#allocation7 + $0x68] sm:$0xf]
    %v2005 = vld [vmem:[#allocation7 + $0x6c] sm:$0xf]
    %v2006 = vld [vmem:[#allocation7 + $0x70] sm:$0xf]
    %v2007 = vld [vmem:[#allocation7 + $0x74] sm:$0xf]
    %v2008 = vld [vmem:[#allocation7 + $0x78] sm:$0xf]
    %v2009 = vld [vmem:[#allocation7 + $0x7c] sm:$0xf]
    %v2010 = vld [vmem:[%s6] sm:$0x1]
    %v2012 = vlaneseq
    %v2013 = vshrl.u32 %v2012, 7
    %v2014 = vsub.s32 0, %v2013
    %v2015 = vrot.slane %v2010, %v2014
    %v2049 = vunpack.c.l.b16 %v1978
    %v2050 = vunpack.c.l.b16 %v1979
    %v2051 = vunpack.c.l.b16 %v1980
    %v2052 = vunpack.c.l.b16 %v1981
    %v2053 = vunpack.c.l.b16 %v1982
    %v2054 = vunpack.c.l.b16 %v1983
    %v2055 = vunpack.c.l.b16 %v1984
    %v2056 = vunpack.c.l.b16 %v1985
    %v2057 = vunpack.c.l.b16 %v1986
    %v2058 = vunpack.c.l.b16 %v1987
    %v2059 = vunpack.c.l.b16 %v1988
    %v2060 = vunpack.c.l.b16 %v1989
    %v2061 = vunpack.c.l.b16 %v1990
    %v2062 = vunpack.c.l.b16 %v1991
    %v2063 = vunpack.c.l.b16 %v1992
    %v2064 = vunpack.c.l.b16 %v1993
    %v2065 = vunpack.c.l.b16 %v1994
    %v2066 = vunpack.c.l.b16 %v1995
    %v2067 = vunpack.c.l.b16 %v1996
    %v2068 = vunpack.c.l.b16 %v1997
    %v2069 = vunpack.c.l.b16 %v1998
    %v2070 = vunpack.c.l.b16 %v1999
    %v2071 = vunpack.c.l.b16 %v2000
    %v2072 = vunpack.c.l.b16 %v2001
    %v2073 = vunpack.c.l.b16 %v2002
    %v2074 = vunpack.c.l.b16 %v2003
    %v2075 = vunpack.c.l.b16 %v2004
    %v2076 = vunpack.c.l.b16 %v2005
    %v2077 = vunpack.c.l.b16 %v2006
    %v2078 = vunpack.c.l.b16 %v2007
    %v2079 = vunpack.c.l.b16 %v2008
    %v2080 = vunpack.c.l.b16 %v2009
    %v2081 = vpack.c.b16 %v2050, %v2049
    %v2082 = vpack.c.b16 %v2052, %v2051
    %v2083 = vpack.c.b16 %v2054, %v2053
    %v2084 = vpack.c.b16 %v2056, %v2055
    %v2085 = vpack.c.b16 %v2058, %v2057
    %v2086 = vpack.c.b16 %v2060, %v2059
    %v2087 = vpack.c.b16 %v2062, %v2061
    %v2088 = vpack.c.b16 %v2064, %v2063
    %v2089 = vpack.c.b16 %v2066, %v2065
    %v2090 = vpack.c.b16 %v2068, %v2067
    %v2091 = vpack.c.b16 %v2070, %v2069
    %v2092 = vpack.c.b16 %v2072, %v2071
    %v2093 = vpack.c.b16 %v2074, %v2073
    %v2094 = vpack.c.b16 %v2076, %v2075
    %v2095 = vpack.c.b16 %v2078, %v2077
    %v2096 = vpack.c.b16 %v2080, %v2079
    %2113 = vmatprep.subr.bf16.mxu0 0
    %2114 = vmatpush1.bf16.msra.mxu0 %v2088
    %2115 = vmatprep.subr.bf16.mxu0 0
    %2116 = vmatpush1.bf16.msra.mxu0 %v2087
    %2117 = vmatprep.subr.bf16.mxu0 0
    %2118 = vmatpush1.bf16.msra.mxu0 %v2086
    %2119 = vmatprep.subr.bf16.mxu0 0
    %2120 = vmatpush1.bf16.msra.mxu0 %v2085
    %2121 = vmatprep.subr.bf16.mxu0 0
    %2122 = vmatpush1.bf16.msra.mxu0 %v2084
    %2123 = vmatprep.subr.bf16.mxu0 0
    %2124 = vmatpush1.bf16.msra.mxu0 %v2083
    %2125 = vmatprep.subr.bf16.mxu0 0
    %2126 = vmatpush1.bf16.msra.mxu0 %v2082
    %2127 = vmatprep.subr.bf16.mxu0 0
    %2128 = vmatpush1.bf16.msra.mxu0 %v2081
    %2129 = vmatprep.subr.bf16.mxu0 0
    %2130 = vmatpush2.bf16.msra.mxu0 %v2096
    %2131 = vmatprep.subr.bf16.mxu0 0
    %2132 = vmatpush2.bf16.msra.mxu0 %v2095
    %2133 = vmatprep.subr.bf16.mxu0 0
    %2134 = vmatpush2.bf16.msra.mxu0 %v2094
    %2135 = vmatprep.subr.bf16.mxu0 0
    %2136 = vmatpush2.bf16.msra.mxu0 %v2093
    %2137 = vmatprep.subr.bf16.mxu0 0
    %2138 = vmatpush2.bf16.msra.mxu0 %v2092
    %2139 = vmatprep.subr.bf16.mxu0 0
    %2140 = vmatpush2.bf16.msra.mxu0 %v2091
    %2141 = vmatprep.subr.bf16.mxu0 0
    %2142 = vmatpush2.bf16.msra.mxu0 %v2090
    %2143 = vmatprep.subr.bf16.mxu0 0
    %2144 = vmatpush2.bf16.msra.mxu0 %v2089
    %2145 = vmatprep.mubr.bf16.mxu0 %v1975
    %2146 = vmatmul.mubr.bf16.gmra.mxu0 %v1974
    %v2147 = vpop.f32.mrf.mxu0
    %v2148 = vadd.f32 %v2015, %v2147
    %v2149 = vpop.f32.mrf.mxu0
    %v2150 = vpop.f32.mrf.mxu0
    %v2151 = vadd.f32 %v2015, %v2150
    %v2152 = vpop.f32.mrf.mxu0
    %2153 = vmatprep.mubr.bf16.mxu0 %v1977
    %2154 = vmatmul.mubr.bf16.gmra.mxu0 %v1976
    %v2155 = vpop.f32.mrf.mxu0
    %v2156 = vadd.f32 %v2015, %v2155
    %v2157 = vpop.f32.mrf.mxu0
    %v2158 = vpop.f32.mrf.mxu0
    %v2159 = vpop.f32.mrf.mxu0
    %2160 = vdwg.mxu0
    %2161 = vst [vmem:[#allocation8] sm:$0xff] %v2148
    %2162 = vst [vmem:[#allocation8 + $0x8] sm:$0xff] %v2151
    %2163 = vst [vmem:[#allocation8 + $0x10] sm:$0xff] %v2156
    // Predicated region
    $region42: #{matching_model_forward.1} parent=1 // pred_check
      _
    $region43: #{matching_model_forward.1} parent=1 // pred_check_branch
      %2165 = sbr.rel (0) target = $region45
    $region44: #{matching_model_forward.1} parent=1 // pred_region
      %s2167 = ssub.s32 384, 384
      %2168 = vsyncadd [#allocation4], %s2167
      %s2169 = sshll.u32 [#allocation8], 4
      %s2170 = int_to_ptr.vmem [resolvable:$true] %s2169
      %2175 = dma.vmem_to_hbm [thread:$0]  %s2170, 384, %s7, [#allocation4], 128, 128, 8
    $region45: #{matching_model_forward.1} parent=1 // pred_fallthru
      _
    // Predicated region
    $region46: #{matching_model_forward.1} parent=1 // pred_check
      _
    $region47: #{matching_model_forward.1} parent=1 // pred_check_branch
      %2177 = sbr.rel (0) target = $region49
    $region48: #{matching_model_forward.1} parent=1 // pred_region
      %2178 = dma.done [#allocation4], 384
    $region49: #{matching_model_forward.1} parent=1 // pred_fallthru
      _
    %2179 = vsyncpa [#allocation3], 1
    %2180 = vsyncpa [#allocation6], 1
    %2181 = vsyncpa [#allocation4], 1

</llo_original>
